<compile_context>
chip_gen: v7x
topology: tpu7x:2x2x1
jax: 0.10.0
libtpu: 0.0.40
codegen_flags: <defaults>
</compile_context>

<pallas_src>
import functools

import jax
import jax.numpy as jnp
import numpy as np
from jax.experimental import pallas as pl
from jax.experimental.pallas import tpu as pltpu


def _resblock_kernel(x_ref, w1_ref, g1_ref, b1_ref, w2_ref, g2_ref, b2_ref,
                     r_ref, rt_ref, out_ref, pad_ref,
                     *, n_batch, height, width, channels):
    N, H, W, C = n_batch, height, width, channels
    Hp = H + 2                       # per-image frame height in the pad scratch
    WC = W * C                       # lane width (one full 128-lane tile here)
    M = N * Hp - 2                   # rows produced by each banded matmul
    eps = 1e-5
    slope = 0.2
    inv_cnt = 1.0 / float(N * H * W)
    f32 = jnp.float32
    bf16 = jnp.bfloat16

    # ---- fill the H-padded scratch: zero halo rows (once) + interior copy ----
    zrow = jnp.zeros((1, WC), f32)
    for n in range(N):
        r0 = n * Hp
        pad_ref[r0:r0 + 1, :] = zrow
        pad_ref[r0 + 1:r0 + 1 + H, :] = x_ref[n * H:(n + 1) * H, :]
        pad_ref[r0 + 1 + H:r0 + 2 + H, :] = zrow

    # Row n*Hp + h (h < H) of a conv result is image n's output row h; the two
    # rows per interior image boundary are junk -> masked out of the BN stats.
    valid = (jax.lax.broadcasted_iota(jnp.int32, (M, WC), 0) % Hp) < H
    maskf = valid.astype(f32)

    def conv3x3(w_ref):
        # One (M, WC) @ (WC, WC) bf16 MXU matmul per ky, chained f32 accumulate.
        acc = jnp.dot(pad_ref[0:M, :].astype(bf16), w_ref[0],
                      preferred_element_type=f32)
        acc = acc + jnp.dot(pad_ref[1:M + 1, :].astype(bf16), w_ref[1],
                            preferred_element_type=f32)
        acc = acc + jnp.dot(pad_ref[2:M + 2, :].astype(bf16), w_ref[2],
                            preferred_element_type=f32)
        return acc                                             # (M, WC) f32

    def bn_scale_shift(acc, g_ref, b_ref):
        # Training-mode BN (batch mean / biased variance over N,H,W), all f32.
        colsum = jnp.sum(acc * maskf, axis=0, keepdims=True)           # (1, WC)
        colsq = jnp.sum(acc * acc * maskf, axis=0, keepdims=True)      # (1, WC)
        stats = jnp.concatenate([colsum, colsq], axis=0)               # (2, WC)
        ch = jnp.dot(stats, r_ref[...], preferred_element_type=f32)    # (2, C)
        mean = ch[0:1, :] * inv_cnt
        var = ch[1:2, :] * inv_cnt - mean * mean                       # biased
        scale = g_ref[...] * jax.lax.rsqrt(var + eps)                  # (1, C)
        shift = b_ref[...] - mean * scale                              # (1, C)
        ss = jnp.concatenate([scale, shift], axis=0)                   # (2, C)
        st = jnp.dot(ss, rt_ref[...], preferred_element_type=f32)      # (2, WC)
        return st[0:1, :], st[1:2, :]

    def lrelu(y):
        return jnp.where(y > 0, y, slope * y)

    # ---- stage 1: conv1 -> bn1 -> lrelu, repacked into the scratch interior --
    acc1 = conv3x3(w1_ref)
    s1, t1 = bn_scale_shift(acc1, g1_ref, b1_ref)
    for n in range(N):
        y1 = lrelu(acc1[n * Hp:n * Hp + H, :] * s1 + t1)
        pad_ref[n * Hp + 1:n * Hp + 1 + H, :] = y1
    # Halo rows were never touched, i.e. still exactly zero -> no re-zeroing.

    # ---- stage 2: conv2 -> bn2 -> +residual -> lrelu -> out ------------------
    acc2 = conv3x3(w2_ref)
    s2, t2 = bn_scale_shift(acc2, g2_ref, b2_ref)
    for n in range(N):
        y2 = acc2[n * Hp:n * Hp + H, :] * s2 + t2 + x_ref[n * H:(n + 1) * H, :]
        out_ref[n * H:(n + 1) * H, :] = lrelu(y2).astype(out_ref.dtype)


def _pack_banded(w, width, channels):
    """(Cout, Cin, 3, 3) -> (3, W*Cin, W*Cout) block-tridiagonal bf16 matrices.

    B_dy[wi*Cin + ci, wo*Cout + co] = w[co, ci, dy, wi - wo + 1] for
    |wi - wo| <= 1, else 0 (conv zero padding) -- no halo rows/columns.
    """
    W, C = width, channels
    wt = jnp.transpose(w, (2, 3, 1, 0)).astype(jnp.float32)    # (ky, kx, Ci, Co)
    mats = []
    for dy in range(3):
        m = jnp.zeros((W * C, W * C), jnp.float32)
        for dx in range(3):
            m = m + jnp.kron(jnp.eye(W, W, k=1 - dx, dtype=jnp.float32),
                             wt[dy, dx])
        mats.append(m)
    return jnp.stack(mats, axis=0).astype(jnp.bfloat16)        # (3, WC, WC)


@jax.jit
def resblock_pallas(x_nchw, w1, g1, b1, w2, g2, b2):
    """x_nchw: (N, C, H, W); w*: (C, C, 3, 3); g*, b*: (C,). Returns NCHW."""
    N, C, H, W = x_nchw.shape
    WC = W * C

    # NCHW -> NHWC -> lane-dense (N*H, W*C) rows.  No W halo, no H padding:
    # the kernel owns the H-halo scratch.
    x2d = jnp.transpose(x_nchw, (0, 2, 3, 1)).astype(jnp.float32).reshape(N * H, WC)

    w1b = _pack_banded(w1, W, C)
    w2b = _pack_banded(w2, W, C)

    # 0/1 fold (lanes -> channels) and broadcast (channels -> lanes) matrices
    # for the per-channel BN statistics.
    r_mat = jnp.tile(jnp.eye(C, dtype=jnp.float32), (W, 1))    # (WC, C)
    rt_mat = r_mat.T                                           # (C, WC)

    kernel = functools.partial(_resblock_kernel, n_batch=N, height=H,
                               width=W, channels=C)
    vmem = pl.BlockSpec(memory_space=pltpu.MemorySpace.VMEM)

    out2d = pl.pallas_call(
        kernel,
        out_shape=jax.ShapeDtypeStruct((N * H, WC), jnp.float32),
        in_specs=[vmem] * 9,
        out_specs=vmem,
        scratch_shapes=[pltpu.VMEM((N * (H + 2), WC), jnp.float32)],
        input_output_aliases={0: 0},
        compiler_params=pltpu.CompilerParams(vmem_limit_bytes=32 * 1024 * 1024),
    )(x2d, w1b,
      g1.reshape(1, C).astype(jnp.float32), b1.reshape(1, C).astype(jnp.float32),
      w2b,
      g2.reshape(1, C).astype(jnp.float32), b2.reshape(1, C).astype(jnp.float32),
      r_mat, rt_mat)

    out = out2d.reshape(N, H, W, C)
    return jnp.transpose(out, (0, 3, 1, 2))


# ----------------------------- pure-JAX reference ---------------------------
def resblock_ref(x, w1, g1, b1, w2, g2, b2):
    def conv(x, w):
        return jax.lax.conv_general_dilated(
            x, w, window_strides=(1, 1), padding=((1, 1), (1, 1)),
            dimension_numbers=("NCHW", "OIHW", "NCHW"))

    def bn(y, g, b):
        mean = jnp.mean(y, axis=(0, 2, 3), keepdims=True)
        var = jnp.mean((y - mean) ** 2, axis=(0, 2, 3), keepdims=True)
        return (y - mean) * jax.lax.rsqrt(var + 1e-5) * g.reshape(1, -1, 1, 1) \
            + b.reshape(1, -1, 1, 1)

    def lrelu(y):
        return jnp.where(y > 0, y, 0.2 * y)

    out = lrelu(bn(conv(x, w1), g1, b1))
    out = bn(conv(out, w2), g2, b2) + x
    return lrelu(out)


if __name__ == "__main__":
    # Residual add requires in_channel == out_channel, stride == 1;
    # W*C = 128 makes the lane axis exactly one full vreg width.
    N, C, H, W = 2, 8, 16, 16
    key = jax.random.PRNGKey(0)
    kx, kw1, kw2, kg1, kb1, kg2, kb2 = jax.random.split(key, 7)

    x = jax.random.normal(kx, (N, C, H, W), jnp.float32)
    w1 = jax.random.normal(kw1, (C, C, 3, 3), jnp.float32) * 0.1
    w2 = jax.random.normal(kw2, (C, C, 3, 3), jnp.float32) * 0.1
    g1 = 1.0 + 0.1 * jax.random.normal(kg1, (C,), jnp.float32)
    b1 = 0.1 * jax.random.normal(kb1, (C,), jnp.float32)
    g2 = 1.0 + 0.1 * jax.random.normal(kg2, (C,), jnp.float32)
    b2 = 0.1 * jax.random.normal(kb2, (C,), jnp.float32)

    out = jax.block_until_ready(resblock_pallas(x, w1, g1, b1, w2, g2, b2))
    ref = jax.block_until_ready(resblock_ref(x, w1, g1, b1, w2, g2, b2))

    # Tolerance loosened vs. the f32-operand version (2e-4) because the conv
    # matmul operands are bf16; accumulation and BN statistics remain f32.
    np.testing.assert_allclose(np.asarray(out), np.asarray(ref),
                               rtol=3e-2, atol=3e-2)
    print("KERNEL_OK")
</pallas_src>

<mosaic_0001>
module attributes {stable_mosaic.version = 11 : i64} {
  func.func @_resblock_kernel(%arg0: memref<32x128xf32, #tpu.memory_space<vmem>>, %arg1: memref<3x128x128xbf16, #tpu.memory_space<vmem>>, %arg2: memref<1x8xf32, #tpu.memory_space<vmem>>, %arg3: memref<1x8xf32, #tpu.memory_space<vmem>>, %arg4: memref<3x128x128xbf16, #tpu.memory_space<vmem>>, %arg5: memref<1x8xf32, #tpu.memory_space<vmem>>, %arg6: memref<1x8xf32, #tpu.memory_space<vmem>>, %arg7: memref<128x8xf32, #tpu.memory_space<vmem>>, %arg8: memref<8x128xf32, #tpu.memory_space<vmem>>, %arg9: memref<32x128xf32, #tpu.memory_space<vmem>>, %arg10: memref<36x128xf32, #tpu.memory_space<vmem>>) attributes {dimension_semantics = [], scalar_prefetch = 0 : i64, scratch_operands = 1 : i64, tpu.core_type = #tpu.core_type<tc>} {
    %cst = arith.constant 0.000000e+00 : f32
    %0 = vector.broadcast %cst : f32 to vector<1x128xf32>
    %c0 = arith.constant 0 : index
    %c0_0 = arith.constant 0 : index
    %1 = vector.load %arg10[%c0, %c0_0] : memref<36x128xf32, #tpu.memory_space<vmem>>, vector<1x128xf32>
    tpu.vector_store %arg10[%c0, %c0_0], %0 {strides = array<i32>} : memref<36x128xf32, #tpu.memory_space<vmem>>, vector<1x128xf32>,
    %c0_1 = arith.constant 0 : index
    %c0_2 = arith.constant 0 : index
    %2 = vector.load %arg0[%c0_1, %c0_2] : memref<32x128xf32, #tpu.memory_space<vmem>>, vector<16x128xf32>
    %c1 = arith.constant 1 : index
    %c0_3 = arith.constant 0 : index
    %3 = vector.load %arg10[%c1, %c0_3] : memref<36x128xf32, #tpu.memory_space<vmem>>, vector<16x128xf32>
    tpu.vector_store %arg10[%c1, %c0_3], %2 {strides = array<i32>} : memref<36x128xf32, #tpu.memory_space<vmem>>, vector<16x128xf32>,
    %c17 = arith.constant 17 : index
    %c0_4 = arith.constant 0 : index
    %4 = vector.load %arg10[%c17, %c0_4] : memref<36x128xf32, #tpu.memory_space<vmem>>, vector<1x128xf32>
    tpu.vector_store %arg10[%c17, %c0_4], %0 {strides = array<i32>} : memref<36x128xf32, #tpu.memory_space<vmem>>, vector<1x128xf32>,
    %c18 = arith.constant 18 : index
    %c0_5 = arith.constant 0 : index
    %5 = vector.load %arg10[%c18, %c0_5] : memref<36x128xf32, #tpu.memory_space<vmem>>, vector<1x128xf32>
    tpu.vector_store %arg10[%c18, %c0_5], %0 {strides = array<i32>} : memref<36x128xf32, #tpu.memory_space<vmem>>, vector<1x128xf32>,
    %c16 = arith.constant 16 : index
    %c0_6 = arith.constant 0 : index
    %6 = vector.load %arg0[%c16, %c0_6] : memref<32x128xf32, #tpu.memory_space<vmem>>, vector<16x128xf32>
    %c19 = arith.constant 19 : index
    %c0_7 = arith.constant 0 : index
    %7 = vector.load %arg10[%c19, %c0_7] : memref<36x128xf32, #tpu.memory_space<vmem>>, vector<16x128xf32>
    tpu.vector_store %arg10[%c19, %c0_7], %6 {strides = array<i32>} : memref<36x128xf32, #tpu.memory_space<vmem>>, vector<16x128xf32>,
    %c35 = arith.constant 35 : index
    %c0_8 = arith.constant 0 : index
    %8 = vector.load %arg10[%c35, %c0_8] : memref<36x128xf32, #tpu.memory_space<vmem>>, vector<1x128xf32>
    tpu.vector_store %arg10[%c35, %c0_8], %0 {strides = array<i32>} : memref<36x128xf32, #tpu.memory_space<vmem>>, vector<1x128xf32>,
    %9 = tpu.iota {dimensions = array<i32: 0>} : vector<34x128xi32>
    %c18_i32 = arith.constant 18 : i32
    %c0_i32 = arith.constant 0 : i32
    %10 = arith.cmpi eq, %c18_i32, %c0_i32 : i32
    %c1_i32 = arith.constant 1 : i32
    %11 = arith.select %10, %c1_i32, %c18_i32 : i32
    %12 = vector.broadcast %11 : i32 to vector<34x128xi32>
    %13 = arith.remsi %9, %12 : vector<34x128xi32>
    %c0_i32_9 = arith.constant 0 : i32
    %14 = vector.broadcast %c0_i32_9 : i32 to vector<34x128xi32>
    %15 = arith.cmpi ne, %13, %14 : vector<34x128xi32>
    %c0_i32_10 = arith.constant 0 : i32
    %16 = vector.broadcast %c0_i32_10 : i32 to vector<34x128xi32>
    %17 = arith.cmpi slt, %13, %16 : vector<34x128xi32>
    %c0_i32_11 = arith.constant 0 : i32
    %18 = arith.cmpi slt, %11, %c0_i32_11 : i32
    %19 = vector.broadcast %18 : i1 to vector<34x128xi1>
    %20 = vector.broadcast %19 : vector<34x128xi1> to vector<34x128xi1>
    %21 = arith.xori %17, %20 : vector<34x128xi1>
    %22 = arith.andi %21, %15 : vector<34x128xi1>
    %23 = vector.broadcast %11 : i32 to vector<34x128xi32>
    %24 = arith.addi %13, %23 : vector<34x128xi32>
    %25 = arith.select %22, %24, %13 : vector<34x128xi1>, vector<34x128xi32>
    %c16_i32 = arith.constant 16 : i32
    %26 = vector.broadcast %c16_i32 : i32 to vector<34x128xi32>
    %27 = arith.cmpi slt, %25, %26 : vector<34x128xi32>
    %28 = arith.extui %27 : vector<34x128xi1> to vector<34x128xi32>
    %29 = arith.sitofp %28 : vector<34x128xi32> to vector<34x128xf32>
    %c0_12 = arith.constant 0 : index
    %c0_13 = arith.constant 0 : index
    %30 = vector.load %arg10[%c0_12, %c0_13] : memref<36x128xf32, #tpu.memory_space<vmem>>, vector<34x128xf32>
    %31 = arith.truncf %30 : vector<34x128xf32> to vector<34x128xbf16>
    %c0_14 = arith.constant 0 : index
    %c0_15 = arith.constant 0 : index
    %c0_16 = arith.constant 0 : index
    %32 = vector.load %arg1[%c0_14, %c0_15, %c0_16] : memref<3x128x128xbf16, #tpu.memory_space<vmem>>, vector<1x128x128xbf16>
    %33 = vector.shape_cast %32 : vector<1x128x128xbf16> to vector<128x128xbf16>
    %cst_17 = arith.constant dense<0.000000e+00> : vector<34x128xf32>
    %34 = tpu.matmul %31, %33, %cst_17 {dimension_numbers = #tpu.dot_dimension_numbers<[1], [0], [0], [1], [0, 0, 1, 1], [], []>} : vector<34x128xbf16>, vector<128x128xbf16>, vector<34x128xf32> -> vector<34x128xf32>
    %c1_18 = arith.constant 1 : index
    %c0_19 = arith.constant 0 : index
    %35 = vector.load %arg10[%c1_18, %c0_19] : memref<36x128xf32, #tpu.memory_space<vmem>>, vector<34x128xf32>
    %36 = arith.truncf %35 : vector<34x128xf32> to vector<34x128xbf16>
    %c1_20 = arith.constant 1 : index
    %c0_21 = arith.constant 0 : index
    %c0_22 = arith.constant 0 : index
    %37 = vector.load %arg1[%c1_20, %c0_21, %c0_22] : memref<3x128x128xbf16, #tpu.memory_space<vmem>>, vector<1x128x128xbf16>
    %38 = vector.shape_cast %37 : vector<1x128x128xbf16> to vector<128x128xbf16>
    %cst_23 = arith.constant dense<0.000000e+00> : vector<34x128xf32>
    %39 = tpu.matmul %36, %38, %cst_23 {dimension_numbers = #tpu.dot_dimension_numbers<[1], [0], [0], [1], [0, 0, 1, 1], [], []>} : vector<34x128xbf16>, vector<128x128xbf16>, vector<34x128xf32> -> vector<34x128xf32>
    %40 = arith.addf %34, %39 : vector<34x128xf32>
    %c2 = arith.constant 2 : index
    %c0_24 = arith.constant 0 : index
    %41 = vector.load %arg10[%c2, %c0_24] : memref<36x128xf32, #tpu.memory_space<vmem>>, vector<34x128xf32>
    %42 = arith.truncf %41 : vector<34x128xf32> to vector<34x128xbf16>
    %c2_25 = arith.constant 2 : index
    %c0_26 = arith.constant 0 : index
    %c0_27 = arith.constant 0 : index
    %43 = vector.load %arg1[%c2_25, %c0_26, %c0_27] : memref<3x128x128xbf16, #tpu.memory_space<vmem>>, vector<1x128x128xbf16>
    %44 = vector.shape_cast %43 : vector<1x128x128xbf16> to vector<128x128xbf16>
    %cst_28 = arith.constant dense<0.000000e+00> : vector<34x128xf32>
    %45 = tpu.matmul %42, %44, %cst_28 {dimension_numbers = #tpu.dot_dimension_numbers<[1], [0], [0], [1], [0, 0, 1, 1], [], []>} : vector<34x128xbf16>, vector<128x128xbf16>, vector<34x128xf32> -> vector<34x128xf32>
    %46 = arith.addf %40, %45 : vector<34x128xf32>
    %47 = arith.mulf %46, %29 : vector<34x128xf32>
    %cst_29 = arith.constant dense<0.000000e+00> : vector<128xf32>
    %48 = vector.multi_reduction <add>, %47, %cst_29 [0] : vector<34x128xf32> to vector<128xf32>
    %49 = vector.shape_cast %48 : vector<128xf32> to vector<1x128xf32>
    %50 = arith.mulf %46, %46 : vector<34x128xf32>
    %51 = arith.mulf %50, %29 : vector<34x128xf32>
    %cst_30 = arith.constant dense<0.000000e+00> : vector<128xf32>
    %52 = vector.multi_reduction <add>, %51, %cst_30 [0] : vector<34x128xf32> to vector<128xf32>
    %53 = vector.shape_cast %52 : vector<128xf32> to vector<1x128xf32>
    %54 = tpu.concatenate %49, %53 in 0 : vector<1x128xf32>, vector<1x128xf32> -> vector<2x128xf32>
    %c0_31 = arith.constant 0 : index
    %c0_32 = arith.constant 0 : index
    %55 = vector.load %arg7[%c0_31, %c0_32] : memref<128x8xf32, #tpu.memory_space<vmem>>, vector<128x8xf32>
    %cst_33 = arith.constant dense<0.000000e+00> : vector<2x8xf32>
    %56 = tpu.matmul %54, %55, %cst_33 {dimension_numbers = #tpu.dot_dimension_numbers<[1], [0], [0], [1], [0, 0, 1, 1], [], []>} : vector<2x128xf32>, vector<128x8xf32>, vector<2x8xf32> -> vector<2x8xf32>
    %57 = vector.extract_strided_slice %56 {offsets = [0, 0], sizes = [1, 8], strides = [1, 1]} : vector<2x8xf32> to vector<1x8xf32>
    %cst_34 = arith.constant 0.001953125 : f32
    %58 = vector.broadcast %cst_34 : f32 to vector<1x8xf32>
    %59 = arith.mulf %57, %58 : vector<1x8xf32>
    %60 = vector.extract_strided_slice %56 {offsets = [1, 0], sizes = [1, 8], strides = [1, 1]} : vector<2x8xf32> to vector<1x8xf32>
    %cst_35 = arith.constant 0.001953125 : f32
    %61 = vector.broadcast %cst_35 : f32 to vector<1x8xf32>
    %62 = arith.mulf %60, %61 : vector<1x8xf32>
    %63 = arith.mulf %59, %59 : vector<1x8xf32>
    %64 = arith.subf %62, %63 : vector<1x8xf32>
    %c0_36 = arith.constant 0 : index
    %c0_37 = arith.constant 0 : index
    %65 = vector.load %arg2[%c0_36, %c0_37] : memref<1x8xf32, #tpu.memory_space<vmem>>, vector<1x8xf32>
    %cst_38 = arith.constant 9.99999974E-6 : f32
    %66 = vector.broadcast %cst_38 : f32 to vector<1x8xf32>
    %67 = arith.addf %64, %66 : vector<1x8xf32>
    %68 = math.rsqrt %67 : vector<1x8xf32>
    %69 = arith.mulf %65, %68 : vector<1x8xf32>
    %c0_39 = arith.constant 0 : index
    %c0_40 = arith.constant 0 : index
    %70 = vector.load %arg3[%c0_39, %c0_40] : memref<1x8xf32, #tpu.memory_space<vmem>>, vector<1x8xf32>
    %71 = arith.mulf %59, %69 : vector<1x8xf32>
    %72 = arith.subf %70, %71 : vector<1x8xf32>
    %73 = tpu.concatenate %69, %72 in 0 : vector<1x8xf32>, vector<1x8xf32> -> vector<2x8xf32>
    %c0_41 = arith.constant 0 : index
    %c0_42 = arith.constant 0 : index
    %74 = vector.load %arg8[%c0_41, %c0_42] : memref<8x128xf32, #tpu.memory_space<vmem>>, vector<8x128xf32>
    %cst_43 = arith.constant dense<0.000000e+00> : vector<2x128xf32>
    %75 = tpu.matmul %73, %74, %cst_43 {dimension_numbers = #tpu.dot_dimension_numbers<[1], [0], [0], [1], [0, 0, 1, 1], [], []>} : vector<2x8xf32>, vector<8x128xf32>, vector<2x128xf32> -> vector<2x128xf32>
    %76 = vector.extract_strided_slice %75 {offsets = [0, 0], sizes = [1, 128], strides = [1, 1]} : vector<2x128xf32> to vector<1x128xf32>
    %77 = vector.extract_strided_slice %75 {offsets = [1, 0], sizes = [1, 128], strides = [1, 1]} : vector<2x128xf32> to vector<1x128xf32>
    %78 = vector.extract_strided_slice %46 {offsets = [0, 0], sizes = [16, 128], strides = [1, 1]} : vector<34x128xf32> to vector<16x128xf32>
    %79 = vector.broadcast %76 : vector<1x128xf32> to vector<16x128xf32>
    %80 = arith.mulf %78, %79 : vector<16x128xf32>
    %81 = vector.broadcast %77 : vector<1x128xf32> to vector<16x128xf32>
    %82 = arith.addf %80, %81 : vector<16x128xf32>
    %cst_44 = arith.constant 0.000000e+00 : f32
    %83 = vector.broadcast %cst_44 : f32 to vector<16x128xf32>
    %84 = arith.cmpf ogt, %82, %83 : vector<16x128xf32>
    %cst_45 = arith.constant 2.000000e-01 : f32
    %85 = vector.broadcast %cst_45 : f32 to vector<16x128xf32>
    %86 = arith.mulf %85, %82 : vector<16x128xf32>
    %87 = arith.select %84, %82, %86 : vector<16x128xi1>, vector<16x128xf32>
    %c1_46 = arith.constant 1 : index
    %c0_47 = arith.constant 0 : index
    %88 = vector.load %arg10[%c1_46, %c0_47] : memref<36x128xf32, #tpu.memory_space<vmem>>, vector<16x128xf32>
    tpu.vector_store %arg10[%c1_46, %c0_47], %87 {strides = array<i32>} : memref<36x128xf32, #tpu.memory_space<vmem>>, vector<16x128xf32>,
    %89 = vector.extract_strided_slice %46 {offsets = [18, 0], sizes = [16, 128], strides = [1, 1]} : vector<34x128xf32> to vector<16x128xf32>
    %90 = vector.broadcast %76 : vector<1x128xf32> to vector<16x128xf32>
    %91 = arith.mulf %89, %90 : vector<16x128xf32>
    %92 = vector.broadcast %77 : vector<1x128xf32> to vector<16x128xf32>
    %93 = arith.addf %91, %92 : vector<16x128xf32>
    %cst_48 = arith.constant 0.000000e+00 : f32
    %94 = vector.broadcast %cst_48 : f32 to vector<16x128xf32>
    %95 = arith.cmpf ogt, %93, %94 : vector<16x128xf32>
    %cst_49 = arith.constant 2.000000e-01 : f32
    %96 = vector.broadcast %cst_49 : f32 to vector<16x128xf32>
    %97 = arith.mulf %96, %93 : vector<16x128xf32>
    %98 = arith.select %95, %93, %97 : vector<16x128xi1>, vector<16x128xf32>
    %c19_50 = arith.constant 19 : index
    %c0_51 = arith.constant 0 : index
    %99 = vector.load %arg10[%c19_50, %c0_51] : memref<36x128xf32, #tpu.memory_space<vmem>>, vector<16x128xf32>
    tpu.vector_store %arg10[%c19_50, %c0_51], %98 {strides = array<i32>} : memref<36x128xf32, #tpu.memory_space<vmem>>, vector<16x128xf32>,
    %c0_52 = arith.constant 0 : index
    %c0_53 = arith.constant 0 : index
    %100 = vector.load %arg10[%c0_52, %c0_53] : memref<36x128xf32, #tpu.memory_space<vmem>>, vector<34x128xf32>
    %101 = arith.truncf %100 : vector<34x128xf32> to vector<34x128xbf16>
    %c0_54 = arith.constant 0 : index
    %c0_55 = arith.constant 0 : index
    %c0_56 = arith.constant 0 : index
    %102 = vector.load %arg4[%c0_54, %c0_55, %c0_56] : memref<3x128x128xbf16, #tpu.memory_space<vmem>>, vector<1x128x128xbf16>
    %103 = vector.shape_cast %102 : vector<1x128x128xbf16> to vector<128x128xbf16>
    %cst_57 = arith.constant dense<0.000000e+00> : vector<34x128xf32>
    %104 = tpu.matmul %101, %103, %cst_57 {dimension_numbers = #tpu.dot_dimension_numbers<[1], [0], [0], [1], [0, 0, 1, 1], [], []>} : vector<34x128xbf16>, vector<128x128xbf16>, vector<34x128xf32> -> vector<34x128xf32>
    %c1_58 = arith.constant 1 : index
    %c0_59 = arith.constant 0 : index
    %105 = vector.load %arg10[%c1_58, %c0_59] : memref<36x128xf32, #tpu.memory_space<vmem>>, vector<34x128xf32>
    %106 = arith.truncf %105 : vector<34x128xf32> to vector<34x128xbf16>
    %c1_60 = arith.constant 1 : index
    %c0_61 = arith.constant 0 : index
    %c0_62 = arith.constant 0 : index
    %107 = vector.load %arg4[%c1_60, %c0_61, %c0_62] : memref<3x128x128xbf16, #tpu.memory_space<vmem>>, vector<1x128x128xbf16>
    %108 = vector.shape_cast %107 : vector<1x128x128xbf16> to vector<128x128xbf16>
    %cst_63 = arith.constant dense<0.000000e+00> : vector<34x128xf32>
    %109 = tpu.matmul %106, %108, %cst_63 {dimension_numbers = #tpu.dot_dimension_numbers<[1], [0], [0], [1], [0, 0, 1, 1], [], []>} : vector<34x128xbf16>, vector<128x128xbf16>, vector<34x128xf32> -> vector<34x128xf32>
    %110 = arith.addf %104, %109 : vector<34x128xf32>
    %c2_64 = arith.constant 2 : index
    %c0_65 = arith.constant 0 : index
    %111 = vector.load %arg10[%c2_64, %c0_65] : memref<36x128xf32, #tpu.memory_space<vmem>>, vector<34x128xf32>
    %112 = arith.truncf %111 : vector<34x128xf32> to vector<34x128xbf16>
    %c2_66 = arith.constant 2 : index
    %c0_67 = arith.constant 0 : index
    %c0_68 = arith.constant 0 : index
    %113 = vector.load %arg4[%c2_66, %c0_67, %c0_68] : memref<3x128x128xbf16, #tpu.memory_space<vmem>>, vector<1x128x128xbf16>
    %114 = vector.shape_cast %113 : vector<1x128x128xbf16> to vector<128x128xbf16>
    %cst_69 = arith.constant dense<0.000000e+00> : vector<34x128xf32>
    %115 = tpu.matmul %112, %114, %cst_69 {dimension_numbers = #tpu.dot_dimension_numbers<[1], [0], [0], [1], [0, 0, 1, 1], [], []>} : vector<34x128xbf16>, vector<128x128xbf16>, vector<34x128xf32> -> vector<34x128xf32>
    %116 = arith.addf %110, %115 : vector<34x128xf32>
    %117 = arith.mulf %116, %29 : vector<34x128xf32>
    %cst_70 = arith.constant dense<0.000000e+00> : vector<128xf32>
    %118 = vector.multi_reduction <add>, %117, %cst_70 [0] : vector<34x128xf32> to vector<128xf32>
    %119 = vector.shape_cast %118 : vector<128xf32> to vector<1x128xf32>
    %120 = arith.mulf %116, %116 : vector<34x128xf32>
    %121 = arith.mulf %120, %29 : vector<34x128xf32>
    %cst_71 = arith.constant dense<0.000000e+00> : vector<128xf32>
    %122 = vector.multi_reduction <add>, %121, %cst_71 [0] : vector<34x128xf32> to vector<128xf32>
    %123 = vector.shape_cast %122 : vector<128xf32> to vector<1x128xf32>
    %124 = tpu.concatenate %119, %123 in 0 : vector<1x128xf32>, vector<1x128xf32> -> vector<2x128xf32>
    %c0_72 = arith.constant 0 : index
    %c0_73 = arith.constant 0 : index
    %125 = vector.load %arg7[%c0_72, %c0_73] : memref<128x8xf32, #tpu.memory_space<vmem>>, vector<128x8xf32>
    %cst_74 = arith.constant dense<0.000000e+00> : vector<2x8xf32>
    %126 = tpu.matmul %124, %125, %cst_74 {dimension_numbers = #tpu.dot_dimension_numbers<[1], [0], [0], [1], [0, 0, 1, 1], [], []>} : vector<2x128xf32>, vector<128x8xf32>, vector<2x8xf32> -> vector<2x8xf32>
    %127 = vector.extract_strided_slice %126 {offsets = [0, 0], sizes = [1, 8], strides = [1, 1]} : vector<2x8xf32> to vector<1x8xf32>
    %cst_75 = arith.constant 0.001953125 : f32
    %128 = vector.broadcast %cst_75 : f32 to vector<1x8xf32>
    %129 = arith.mulf %127, %128 : vector<1x8xf32>
    %130 = vector.extract_strided_slice %126 {offsets = [1, 0], sizes = [1, 8], strides = [1, 1]} : vector<2x8xf32> to vector<1x8xf32>
    %cst_76 = arith.constant 0.001953125 : f32
    %131 = vector.broadcast %cst_76 : f32 to vector<1x8xf32>
    %132 = arith.mulf %130, %131 : vector<1x8xf32>
    %133 = arith.mulf %129, %129 : vector<1x8xf32>
    %134 = arith.subf %132, %133 : vector<1x8xf32>
    %c0_77 = arith.constant 0 : index
    %c0_78 = arith.constant 0 : index
    %135 = vector.load %arg5[%c0_77, %c0_78] : memref<1x8xf32, #tpu.memory_space<vmem>>, vector<1x8xf32>
    %cst_79 = arith.constant 9.99999974E-6 : f32
    %136 = vector.broadcast %cst_79 : f32 to vector<1x8xf32>
    %137 = arith.addf %134, %136 : vector<1x8xf32>
    %138 = math.rsqrt %137 : vector<1x8xf32>
    %139 = arith.mulf %135, %138 : vector<1x8xf32>
    %c0_80 = arith.constant 0 : index
    %c0_81 = arith.constant 0 : index
    %140 = vector.load %arg6[%c0_80, %c0_81] : memref<1x8xf32, #tpu.memory_space<vmem>>, vector<1x8xf32>
    %141 = arith.mulf %129, %139 : vector<1x8xf32>
    %142 = arith.subf %140, %141 : vector<1x8xf32>
    %143 = tpu.concatenate %139, %142 in 0 : vector<1x8xf32>, vector<1x8xf32> -> vector<2x8xf32>
    %c0_82 = arith.constant 0 : index
    %c0_83 = arith.constant 0 : index
    %144 = vector.load %arg8[%c0_82, %c0_83] : memref<8x128xf32, #tpu.memory_space<vmem>>, vector<8x128xf32>
    %cst_84 = arith.constant dense<0.000000e+00> : vector<2x128xf32>
    %145 = tpu.matmul %143, %144, %cst_84 {dimension_numbers = #tpu.dot_dimension_numbers<[1], [0], [0], [1], [0, 0, 1, 1], [], []>} : vector<2x8xf32>, vector<8x128xf32>, vector<2x128xf32> -> vector<2x128xf32>
    %146 = vector.extract_strided_slice %145 {offsets = [0, 0], sizes = [1, 128], strides = [1, 1]} : vector<2x128xf32> to vector<1x128xf32>
    %147 = vector.extract_strided_slice %145 {offsets = [1, 0], sizes = [1, 128], strides = [1, 1]} : vector<2x128xf32> to vector<1x128xf32>
    %148 = vector.extract_strided_slice %116 {offsets = [0, 0], sizes = [16, 128], strides = [1, 1]} : vector<34x128xf32> to vector<16x128xf32>
    %149 = vector.broadcast %146 : vector<1x128xf32> to vector<16x128xf32>
    %150 = arith.mulf %148, %149 : vector<16x128xf32>
    %151 = vector.broadcast %147 : vector<1x128xf32> to vector<16x128xf32>
    %152 = arith.addf %150, %151 : vector<16x128xf32>
    %c0_85 = arith.constant 0 : index
    %c0_86 = arith.constant 0 : index
    %153 = vector.load %arg0[%c0_85, %c0_86] : memref<32x128xf32, #tpu.memory_space<vmem>>, vector<16x128xf32>
    %154 = arith.addf %152, %153 : vector<16x128xf32>
    %cst_87 = arith.constant 0.000000e+00 : f32
    %155 = vector.broadcast %cst_87 : f32 to vector<16x128xf32>
    %156 = arith.cmpf ogt, %154, %155 : vector<16x128xf32>
    %cst_88 = arith.constant 2.000000e-01 : f32
    %157 = vector.broadcast %cst_88 : f32 to vector<16x128xf32>
    %158 = arith.mulf %157, %154 : vector<16x128xf32>
    %159 = arith.select %156, %154, %158 : vector<16x128xi1>, vector<16x128xf32>
    %c0_89 = arith.constant 0 : index
    %c0_90 = arith.constant 0 : index
    %160 = vector.load %arg9[%c0_89, %c0_90] : memref<32x128xf32, #tpu.memory_space<vmem>>, vector<16x128xf32>
    tpu.vector_store %arg9[%c0_89, %c0_90], %159 {strides = array<i32>} : memref<32x128xf32, #tpu.memory_space<vmem>>, vector<16x128xf32>,
    %161 = vector.extract_strided_slice %116 {offsets = [18, 0], sizes = [16, 128], strides = [1, 1]} : vector<34x128xf32> to vector<16x128xf32>
    %162 = vector.broadcast %146 : vector<1x128xf32> to vector<16x128xf32>
    %163 = arith.mulf %161, %162 : vector<16x128xf32>
    %164 = vector.broadcast %147 : vector<1x128xf32> to vector<16x128xf32>
    %165 = arith.addf %163, %164 : vector<16x128xf32>
    %c16_91 = arith.constant 16 : index
    %c0_92 = arith.constant 0 : index
    %166 = vector.load %arg0[%c16_91, %c0_92] : memref<32x128xf32, #tpu.memory_space<vmem>>, vector<16x128xf32>
    %167 = arith.addf %165, %166 : vector<16x128xf32>
    %cst_93 = arith.constant 0.000000e+00 : f32
    %168 = vector.broadcast %cst_93 : f32 to vector<16x128xf32>
    %169 = arith.cmpf ogt, %167, %168 : vector<16x128xf32>
    %cst_94 = arith.constant 2.000000e-01 : f32
    %170 = vector.broadcast %cst_94 : f32 to vector<16x128xf32>
    %171 = arith.mulf %170, %167 : vector<16x128xf32>
    %172 = arith.select %169, %167, %171 : vector<16x128xi1>, vector<16x128xf32>
    %c16_95 = arith.constant 16 : index
    %c0_96 = arith.constant 0 : index
    %173 = vector.load %arg9[%c16_95, %c0_96] : memref<32x128xf32, #tpu.memory_space<vmem>>, vector<16x128xf32>
    tpu.vector_store %arg9[%c16_95, %c0_96], %172 {strides = array<i32>} : memref<32x128xf32, #tpu.memory_space<vmem>>, vector<16x128xf32>,
    return
  }
}

</mosaic_0001>

<llo_original>
// kernel: tile.9
$region0: #{tile.9}
  %s0 = inlined_call_operand.vmem [shape: f32[16,8,8], index: 0, kind: input, shape index: {}]
  %s1 = inlined_call_operand.vmem [shape: f32[128,8], index: 1, kind: output, shape index: {}]
  %s2 = smov 3
  %v3 = vld [vmem:[%s0] ss:$16 sm:%s2]
  %s4 = smov 12
  %v5 = vld [vmem:[%s0] ss:$16 sm:%s4]
  %vm6 = vcmask 1043458
  %v7 = vsel %vm6, %v5, %v3
  %s8 = smov 48
  %v9 = vld [vmem:[%s0] ss:$16 sm:%s8]
  %vm10 = vcmask 1045508
  %v11 = vsel %vm10, %v9, %v7
  %s12 = smov 192
  %v13 = vld [vmem:[%s0] ss:$16 sm:%s12]
  %vm14 = vcmask 1047558
  %v15 = vsel %vm14, %v13, %v11
  %vm16 = vcmask 64512
  %17 = vst.msk [vmem:[%s1] sm:$0xff] %vm16, %v15
  %s18 = scalar_lea.vmem %s0, 15
  %s19 = smov 3
  %v20 = vld [vmem:[%s18] ss:$16 sm:%s19]
  %s21 = scalar_lea.vmem %s0, 15
  %s22 = smov 12
  %v23 = vld [vmem:[%s21] ss:$16 sm:%s22]
  %vm24 = vcmask 1043458
  %v25 = vsel %vm24, %v23, %v20
  %s26 = scalar_lea.vmem %s0, 15
  %s27 = smov 48
  %v28 = vld [vmem:[%s26] ss:$16 sm:%s27]
  %vm29 = vcmask 1045508
  %v30 = vsel %vm29, %v28, %v25
  %s31 = scalar_lea.vmem %s0, 15
  %s32 = smov 192
  %v33 = vld [vmem:[%s31] ss:$16 sm:%s32]
  %vm34 = vcmask 1047558
  %v35 = vsel %vm34, %v33, %v30
  %36 = vrot.lane.b32.xlu0 %v35, 120
  %v37 = vpop.permute.xlu0 %36
  %vm38 = vcmask 1048512
  %39 = vst.msk [vmem:[%s1] sm:$0xff] %vm38, %v37
  %s40 = scalar_lea.vmem %s0, 14
  %s41 = smov 3
  %v42 = vld [vmem:[%s40] ss:$16 sm:%s41]
  %s43 = scalar_lea.vmem %s0, 14
  %s44 = smov 12
  %v45 = vld [vmem:[%s43] ss:$16 sm:%s44]
  %vm46 = vcmask 1043458
  %v47 = vsel %vm46, %v45, %v42
  %s48 = scalar_lea.vmem %s0, 14
  %s49 = smov 48
  %v50 = vld [vmem:[%s48] ss:$16 sm:%s49]
  %vm51 = vcmask 1045508
  %v52 = vsel %vm51, %v50, %v47
  %s53 = scalar_lea.vmem %s0, 14
  %s54 = smov 192
  %v55 = vld [vmem:[%s53] ss:$16 sm:%s54]
  %vm56 = vcmask 1047558
  %v57 = vsel %vm56, %v55, %v52
  %58 = vrot.lane.b32.xlu0 %v57, 112
  %v59 = vpop.permute.xlu0 %58
  %vm60 = vcmask 982912
  %61 = vst.msk [vmem:[%s1] sm:$0xff] %vm60, %v59
  %s62 = scalar_lea.vmem %s0, 13
  %s63 = smov 3
  %v64 = vld [vmem:[%s62] ss:$16 sm:%s63]
  %s65 = scalar_lea.vmem %s0, 13
  %s66 = smov 12
  %v67 = vld [vmem:[%s65] ss:$16 sm:%s66]
  %vm68 = vcmask 1043458
  %v69 = vsel %vm68, %v67, %v64
  %s70 = scalar_lea.vmem %s0, 13
  %s71 = smov 48
  %v72 = vld [vmem:[%s70] ss:$16 sm:%s71]
  %vm73 = vcmask 1045508
  %v74 = vsel %vm73, %v72, %v69
  %s75 = scalar_lea.vmem %s0, 13
  %s76 = smov 192
  %v77 = vld [vmem:[%s75] ss:$16 sm:%s76]
  %vm78 = vcmask 1047558
  %v79 = vsel %vm78, %v77, %v74
  %80 = vrot.lane.b32.xlu0 %v79, 104
  %v81 = vpop.permute.xlu0 %80
  %vm82 = vcmask 917312
  %83 = vst.msk [vmem:[%s1] sm:$0xff] %vm82, %v81
  %s84 = scalar_lea.vmem %s0, 12
  %s85 = smov 3
  %v86 = vld [vmem:[%s84] ss:$16 sm:%s85]
  %s87 = scalar_lea.vmem %s0, 12
  %s88 = smov 12
  %v89 = vld [vmem:[%s87] ss:$16 sm:%s88]
  %vm90 = vcmask 1043458
  %v91 = vsel %vm90, %v89, %v86
  %s92 = scalar_lea.vmem %s0, 12
  %s93 = smov 48
  %v94 = vld [vmem:[%s92] ss:$16 sm:%s93]
  %vm95 = vcmask 1045508
  %v96 = vsel %vm95, %v94, %v91
  %s97 = scalar_lea.vmem %s0, 12
  %s98 = smov 192
  %v99 = vld [vmem:[%s97] ss:$16 sm:%s98]
  %vm100 = vcmask 1047558
  %v101 = vsel %vm100, %v99, %v96
  %102 = vrot.lane.b32.xlu0 %v101, 96
  %v103 = vpop.permute.xlu0 %102
  %vm104 = vcmask 851712
  %105 = vst.msk [vmem:[%s1] sm:$0xff] %vm104, %v103
  %s106 = scalar_lea.vmem %s0, 11
  %s107 = smov 3
  %v108 = vld [vmem:[%s106] ss:$16 sm:%s107]
  %s109 = scalar_lea.vmem %s0, 11
  %s110 = smov 12
  %v111 = vld [vmem:[%s109] ss:$16 sm:%s110]
  %vm112 = vcmask 1043458
  %v113 = vsel %vm112, %v111, %v108
  %s114 = scalar_lea.vmem %s0, 11
  %s115 = smov 48
  %v116 = vld [vmem:[%s114] ss:$16 sm:%s115]
  %vm117 = vcmask 1045508
  %v118 = vsel %vm117, %v116, %v113
  %s119 = scalar_lea.vmem %s0, 11
  %s120 = smov 192
  %v121 = vld [vmem:[%s119] ss:$16 sm:%s120]
  %vm122 = vcmask 1047558
  %v123 = vsel %vm122, %v121, %v118
  %124 = vrot.lane.b32.xlu0 %v123, 88
  %v125 = vpop.permute.xlu0 %124
  %vm126 = vcmask 786112
  %127 = vst.msk [vmem:[%s1] sm:$0xff] %vm126, %v125
  %s128 = scalar_lea.vmem %s0, 10
  %s129 = smov 3
  %v130 = vld [vmem:[%s128] ss:$16 sm:%s129]
  %s131 = scalar_lea.vmem %s0, 10
  %s132 = smov 12
  %v133 = vld [vmem:[%s131] ss:$16 sm:%s132]
  %vm134 = vcmask 1043458
  %v135 = vsel %vm134, %v133, %v130
  %s136 = scalar_lea.vmem %s0, 10
  %s137 = smov 48
  %v138 = vld [vmem:[%s136] ss:$16 sm:%s137]
  %vm139 = vcmask 1045508
  %v140 = vsel %vm139, %v138, %v135
  %s141 = scalar_lea.vmem %s0, 10
  %s142 = smov 192
  %v143 = vld [vmem:[%s141] ss:$16 sm:%s142]
  %vm144 = vcmask 1047558
  %v145 = vsel %vm144, %v143, %v140
  %146 = vrot.lane.b32.xlu0 %v145, 80
  %v147 = vpop.permute.xlu0 %146
  %vm148 = vcmask 720512
  %149 = vst.msk [vmem:[%s1] sm:$0xff] %vm148, %v147
  %s150 = scalar_lea.vmem %s0, 9
  %s151 = smov 3
  %v152 = vld [vmem:[%s150] ss:$16 sm:%s151]
  %s153 = scalar_lea.vmem %s0, 9
  %s154 = smov 12
  %v155 = vld [vmem:[%s153] ss:$16 sm:%s154]
  %vm156 = vcmask 1043458
  %v157 = vsel %vm156, %v155, %v152
  %s158 = scalar_lea.vmem %s0, 9
  %s159 = smov 48
  %v160 = vld [vmem:[%s158] ss:$16 sm:%s159]
  %vm161 = vcmask 1045508
  %v162 = vsel %vm161, %v160, %v157
  %s163 = scalar_lea.vmem %s0, 9
  %s164 = smov 192
  %v165 = vld [vmem:[%s163] ss:$16 sm:%s164]
  %vm166 = vcmask 1047558
  %v167 = vsel %vm166, %v165, %v162
  %168 = vrot.lane.b32.xlu0 %v167, 72
  %v169 = vpop.permute.xlu0 %168
  %vm170 = vcmask 654912
  %171 = vst.msk [vmem:[%s1] sm:$0xff] %vm170, %v169
  %s172 = scalar_lea.vmem %s0, 8
  %s173 = smov 3
  %v174 = vld [vmem:[%s172] ss:$16 sm:%s173]
  %s175 = scalar_lea.vmem %s0, 8
  %s176 = smov 12
  %v177 = vld [vmem:[%s175] ss:$16 sm:%s176]
  %vm178 = vcmask 1043458
  %v179 = vsel %vm178, %v177, %v174
  %s180 = scalar_lea.vmem %s0, 8
  %s181 = smov 48
  %v182 = vld [vmem:[%s180] ss:$16 sm:%s181]
  %vm183 = vcmask 1045508
  %v184 = vsel %vm183, %v182, %v179
  %s185 = scalar_lea.vmem %s0, 8
  %s186 = smov 192
  %v187 = vld [vmem:[%s185] ss:$16 sm:%s186]
  %vm188 = vcmask 1047558
  %v189 = vsel %vm188, %v187, %v184
  %190 = vrot.lane.b32.xlu0 %v189, 64
  %v191 = vpop.permute.xlu0 %190
  %vm192 = vcmask 589312
  %193 = vst.msk [vmem:[%s1] sm:$0xff] %vm192, %v191
  %s194 = scalar_lea.vmem %s0, 7
  %s195 = smov 3
  %v196 = vld [vmem:[%s194] ss:$16 sm:%s195]
  %s197 = scalar_lea.vmem %s0, 7
  %s198 = smov 12
  %v199 = vld [vmem:[%s197] ss:$16 sm:%s198]
  %vm200 = vcmask 1043458
  %v201 = vsel %vm200, %v199, %v196
  %s202 = scalar_lea.vmem %s0, 7
  %s203 = smov 48
  %v204 = vld [vmem:[%s202] ss:$16 sm:%s203]
  %vm205 = vcmask 1045508
  %v206 = vsel %vm205, %v204, %v201
  %s207 = scalar_lea.vmem %s0, 7
  %s208 = smov 192
  %v209 = vld [vmem:[%s207] ss:$16 sm:%s208]
  %vm210 = vcmask 1047558
  %v211 = vsel %vm210, %v209, %v206
  %212 = vrot.lane.b32.xlu0 %v211, 56
  %v213 = vpop.permute.xlu0 %212
  %vm214 = vcmask 523712
  %215 = vst.msk [vmem:[%s1] sm:$0xff] %vm214, %v213
  %s216 = scalar_lea.vmem %s0, 6
  %s217 = smov 3
  %v218 = vld [vmem:[%s216] ss:$16 sm:%s217]
  %s219 = scalar_lea.vmem %s0, 6
  %s220 = smov 12
  %v221 = vld [vmem:[%s219] ss:$16 sm:%s220]
  %vm222 = vcmask 1043458
  %v223 = vsel %vm222, %v221, %v218
  %s224 = scalar_lea.vmem %s0, 6
  %s225 = smov 48
  %v226 = vld [vmem:[%s224] ss:$16 sm:%s225]
  %vm227 = vcmask 1045508
  %v228 = vsel %vm227, %v226, %v223
  %s229 = scalar_lea.vmem %s0, 6
  %s230 = smov 192
  %v231 = vld [vmem:[%s229] ss:$16 sm:%s230]
  %vm232 = vcmask 1047558
  %v233 = vsel %vm232, %v231, %v228
  %234 = vrot.lane.b32.xlu0 %v233, 48
  %v235 = vpop.permute.xlu0 %234
  %vm236 = vcmask 458112
  %237 = vst.msk [vmem:[%s1] sm:$0xff] %vm236, %v235
  %s238 = scalar_lea.vmem %s0, 5
  %s239 = smov 3
  %v240 = vld [vmem:[%s238] ss:$16 sm:%s239]
  %s241 = scalar_lea.vmem %s0, 5
  %s242 = smov 12
  %v243 = vld [vmem:[%s241] ss:$16 sm:%s242]
  %vm244 = vcmask 1043458
  %v245 = vsel %vm244, %v243, %v240
  %s246 = scalar_lea.vmem %s0, 5
  %s247 = smov 48
  %v248 = vld [vmem:[%s246] ss:$16 sm:%s247]
  %vm249 = vcmask 1045508
  %v250 = vsel %vm249, %v248, %v245
  %s251 = scalar_lea.vmem %s0, 5
  %s252 = smov 192
  %v253 = vld [vmem:[%s251] ss:$16 sm:%s252]
  %vm254 = vcmask 1047558
  %v255 = vsel %vm254, %v253, %v250
  %256 = vrot.lane.b32.xlu0 %v255, 40
  %v257 = vpop.permute.xlu0 %256
  %vm258 = vcmask 392512
  %259 = vst.msk [vmem:[%s1] sm:$0xff] %vm258, %v257
  %s260 = scalar_lea.vmem %s0, 4
  %s261 = smov 3
  %v262 = vld [vmem:[%s260] ss:$16 sm:%s261]
  %s263 = scalar_lea.vmem %s0, 4
  %s264 = smov 12
  %v265 = vld [vmem:[%s263] ss:$16 sm:%s264]
  %vm266 = vcmask 1043458
  %v267 = vsel %vm266, %v265, %v262
  %s268 = scalar_lea.vmem %s0, 4
  %s269 = smov 48
  %v270 = vld [vmem:[%s268] ss:$16 sm:%s269]
  %vm271 = vcmask 1045508
  %v272 = vsel %vm271, %v270, %v267
  %s273 = scalar_lea.vmem %s0, 4
  %s274 = smov 192
  %v275 = vld [vmem:[%s273] ss:$16 sm:%s274]
  %vm276 = vcmask 1047558
  %v277 = vsel %vm276, %v275, %v272
  %278 = vrot.lane.b32.xlu0 %v277, 32
  %v279 = vpop.permute.xlu0 %278
  %vm280 = vcmask 326912
  %281 = vst.msk [vmem:[%s1] sm:$0xff] %vm280, %v279
  %s282 = scalar_lea.vmem %s0, 3
  %s283 = smov 3
  %v284 = vld [vmem:[%s282] ss:$16 sm:%s283]
  %s285 = scalar_lea.vmem %s0, 3
  %s286 = smov 12
  %v287 = vld [vmem:[%s285] ss:$16 sm:%s286]
  %vm288 = vcmask 1043458
  %v289 = vsel %vm288, %v287, %v284
  %s290 = scalar_lea.vmem %s0, 3
  %s291 = smov 48
  %v292 = vld [vmem:[%s290] ss:$16 sm:%s291]
  %vm293 = vcmask 1045508
  %v294 = vsel %vm293, %v292, %v289
  %s295 = scalar_lea.vmem %s0, 3
  %s296 = smov 192
  %v297 = vld [vmem:[%s295] ss:$16 sm:%s296]
  %vm298 = vcmask 1047558
  %v299 = vsel %vm298, %v297, %v294
  %300 = vrot.lane.b32.xlu0 %v299, 24
  %v301 = vpop.permute.xlu0 %300
  %vm302 = vcmask 261312
  %303 = vst.msk [vmem:[%s1] sm:$0xff] %vm302, %v301
  %s304 = scalar_lea.vmem %s0, 2
  %s305 = smov 3
  %v306 = vld [vmem:[%s304] ss:$16 sm:%s305]
  %s307 = scalar_lea.vmem %s0, 2
  %s308 = smov 12
  %v309 = vld [vmem:[%s307] ss:$16 sm:%s308]
  %vm310 = vcmask 1043458
  %v311 = vsel %vm310, %v309, %v306
  %s312 = scalar_lea.vmem %s0, 2
  %s313 = smov 48
  %v314 = vld [vmem:[%s312] ss:$16 sm:%s313]
  %vm315 = vcmask 1045508
  %v316 = vsel %vm315, %v314, %v311
  %s317 = scalar_lea.vmem %s0, 2
  %s318 = smov 192
  %v319 = vld [vmem:[%s317] ss:$16 sm:%s318]
  %vm320 = vcmask 1047558
  %v321 = vsel %vm320, %v319, %v316
  %322 = vrot.lane.b32.xlu0 %v321, 16
  %v323 = vpop.permute.xlu0 %322
  %vm324 = vcmask 195712
  %325 = vst.msk [vmem:[%s1] sm:$0xff] %vm324, %v323
  %s326 = scalar_lea.vmem %s0, 1
  %s327 = smov 3
  %v328 = vld [vmem:[%s326] ss:$16 sm:%s327]
  %s329 = scalar_lea.vmem %s0, 1
  %s330 = smov 12
  %v331 = vld [vmem:[%s329] ss:$16 sm:%s330]
  %vm332 = vcmask 1043458
  %v333 = vsel %vm332, %v331, %v328
  %s334 = scalar_lea.vmem %s0, 1
  %s335 = smov 48
  %v336 = vld [vmem:[%s334] ss:$16 sm:%s335]
  %vm337 = vcmask 1045508
  %v338 = vsel %vm337, %v336, %v333
  %s339 = scalar_lea.vmem %s0, 1
  %s340 = smov 192
  %v341 = vld [vmem:[%s339] ss:$16 sm:%s340]
  %vm342 = vcmask 1047558
  %v343 = vsel %vm342, %v341, %v338
  %344 = vrot.lane.b32.xlu0 %v343, 8
  %v345 = vpop.permute.xlu0 %344
  %vm346 = vcmask 130112
  %347 = vst.msk [vmem:[%s1] sm:$0xff] %vm346, %v345

// kernel: resblock_pallas.1
$region0: #{resblock_pallas.1}
  #allocation0 [shape = 'u32[]', space=smem, size = 0x4, offset = 0x4, fixed_abs, tag = 'smem constant byte address 0x4 - core index']
  #allocation1 [shape = 'u32[144,128]{1,0:T(1,128)}', space=vmem, size = 0x12000, scoped, tag = 'internal scratch']
  #allocation2 [shape = 'f32[36,128]{1,0:T(8,128)}', space=vmem, size = 0x5000, scoped, tag = 'scratch operand']
  %s0 = inlined_call_operand.vmem [shape: f32[32,128], index: 0, kind: input, shape index: {}, may-alias: {0,9}]
  %s1 = inlined_call_operand.vmem [shape: bf16[3,128,128], index: 1, kind: input, shape index: {}]
  %s2 = inlined_call_operand.vmem [shape: f32[1,8], index: 2, kind: input, shape index: {}]
  %s3 = inlined_call_operand.vmem [shape: f32[1,8], index: 3, kind: input, shape index: {}]
  %s4 = inlined_call_operand.vmem [shape: bf16[3,128,128], index: 4, kind: input, shape index: {}]
  %s5 = inlined_call_operand.vmem [shape: f32[1,8], index: 5, kind: input, shape index: {}]
  %s6 = inlined_call_operand.vmem [shape: f32[1,8], index: 6, kind: input, shape index: {}]
  %s7 = inlined_call_operand.vmem [shape: f32[128,8], index: 7, kind: input, shape index: {}]
  %s8 = inlined_call_operand.vmem [shape: f32[8,128], index: 8, kind: input, shape index: {}]
  %s9 = inlined_call_operand.vmem [shape: f32[32,128], index: 9, kind: output, shape index: {}, may-alias: {0,9}]
  %s10 = sld [smem:[#allocation0]]
  $region46: #{resblock_pallas.1} parent=0
    _
  %s12 = ssub.s32 1, %s10
  %s13 = scalar_select 0, %s12, %s10
  // Predicated region
  $region2: #{resblock_pallas.1} parent=0 // pred_check
    _
  $region3: #{resblock_pallas.1} parent=0 // pred_check_branch
    %15 = sbr.rel (0) target = $region5
  $region4: #{resblock_pallas.1} parent=0 // pred_region
    _
  $region5: #{resblock_pallas.1} parent=0 // pred_fallthru
    _
  // Predicated region
  $region6: #{resblock_pallas.1} parent=0 // pred_check
    _
  $region7: #{resblock_pallas.1} parent=0 // pred_check_branch
    %17 = sbr.rel (0) target = $region9
  $region8: #{resblock_pallas.1} parent=0 // pred_region
    _
  $region9: #{resblock_pallas.1} parent=0 // pred_fallthru
    _
  // Predicated region
  $region10: #{resblock_pallas.1} parent=0 // pred_check
    _
  $region11: #{resblock_pallas.1} parent=0 // pred_check_branch
    %19 = sbr.rel (0) target = $region13
  $region12: #{resblock_pallas.1} parent=0 // pred_region
    _
  $region13: #{resblock_pallas.1} parent=0 // pred_fallthru
    _
  // Predicated region
  $region14: #{resblock_pallas.1} parent=0 // pred_check
    _
  $region15: #{resblock_pallas.1} parent=0 // pred_check_branch
    %21 = sbr.rel (0) target = $region17
  $region16: #{resblock_pallas.1} parent=0 // pred_region
    _
  $region17: #{resblock_pallas.1} parent=0 // pred_fallthru
    _
  // Predicated region
  $region18: #{resblock_pallas.1} parent=0 // pred_check
    _
  $region19: #{resblock_pallas.1} parent=0 // pred_check_branch
    %23 = sbr.rel (0) target = $region21
  $region20: #{resblock_pallas.1} parent=0 // pred_region
    _
  $region21: #{resblock_pallas.1} parent=0 // pred_fallthru
    _
  // Predicated region
  $region22: #{resblock_pallas.1} parent=0 // pred_check
    _
  $region23: #{resblock_pallas.1} parent=0 // pred_check_branch
    %25 = sbr.rel (0) target = $region25
  $region24: #{resblock_pallas.1} parent=0 // pred_region
    _
  $region25: #{resblock_pallas.1} parent=0 // pred_fallthru
    _
  // Predicated region
  $region26: #{resblock_pallas.1} parent=0 // pred_check
    _
  $region27: #{resblock_pallas.1} parent=0 // pred_check_branch
    %27 = sbr.rel (0) target = $region29
  $region28: #{resblock_pallas.1} parent=0 // pred_region
    _
  $region29: #{resblock_pallas.1} parent=0 // pred_fallthru
    _
  // Predicated region
  $region30: #{resblock_pallas.1} parent=0 // pred_check
    _
  $region31: #{resblock_pallas.1} parent=0 // pred_check_branch
    %29 = sbr.rel (0) target = $region33
  $region32: #{resblock_pallas.1} parent=0 // pred_region
    _
  $region33: #{resblock_pallas.1} parent=0 // pred_fallthru
    _
  // Predicated region
  $region34: #{resblock_pallas.1} parent=0 // pred_check
    _
  $region35: #{resblock_pallas.1} parent=0 // pred_check_branch
    %31 = sbr.rel (0) target = $region37
  $region36: #{resblock_pallas.1} parent=0 // pred_region
    _
  $region37: #{resblock_pallas.1} parent=0 // pred_fallthru
    _
  %33 = vst [vmem:[#allocation2] sm:$0x1] 0.0
  %v34 = vld [vmem:[%s0] sm:$0xff]
  %v35 = vld [vmem:[%s0 + $0x8] sm:$0xff]
  %36 = vst [vmem:[#allocation2 + $0x1] sm:$0xff] %v34
  %37 = vst [vmem:[#allocation2 + $0x9] sm:$0xff] %v35
  %38 = vst [vmem:[#allocation2 + $0x11] sm:$0x1] 0.0
  %39 = vst [vmem:[#allocation2 + $0x12] sm:$0x1] 0.0
  %v40 = vld [vmem:[%s0 + $0x10] sm:$0xff]
  %v41 = vld [vmem:[%s0 + $0x18] sm:$0xff]
  %42 = vst [vmem:[#allocation2 + $0x13] sm:$0xff] %v40
  %43 = vst [vmem:[#allocation2 + $0x1b] sm:$0xff] %v41
  %44 = vst [vmem:[#allocation2 + $0x23] sm:$0x1] 0.0
  %v45 = vlaneseq
  %v46 = vshrl.u32 %v45, 7
  %v47 = vadd.s32 %v46, 8
  %v48 = vadd.s32 %v46, 16
  %v49 = vadd.s32 %v46, 24
  %v50 = vadd.s32 %v46, 32
  %vm51 = vcmp.lt.s32.totalorder %v46, 0
  %v52 = vsub.s32 0, %v46
  %v53 = vsel %vm51, %v52, %v46
  %v54 = vmul.u32.u64.compose %v53, 3817748708
  %v55 = vextract.low.u32 %v54
  %v56 = vextract.high.u32 %v54
  %v57 = vshrl.u32 %v56, 4
  %v58 = vmul.u32 %v57, 18
  %v59 = vsub.s32 %v53, %v58
  %v60 = vsub.s32 0, %v59
  %v61 = vsel %vm51, %v60, %v59
  %vm62 = vcmp.lt.s32.totalorder %v47, 0
  %v63 = vsub.s32 0, %v47
  %v64 = vsel %vm62, %v63, %v47
  %v65 = vmul.u32.u64.compose %v64, 3817748708
  %v66 = vextract.low.u32 %v65
  %v67 = vextract.high.u32 %v65
  %v68 = vshrl.u32 %v67, 4
  %v69 = vmul.u32 %v68, 18
  %v70 = vsub.s32 %v64, %v69
  %v71 = vsub.s32 0, %v70
  %v72 = vsel %vm62, %v71, %v70
  %vm73 = vcmp.lt.s32.totalorder %v48, 0
  %v74 = vsub.s32 0, %v48
  %v75 = vsel %vm73, %v74, %v48
  %v76 = vmul.u32.u64.compose %v75, 3817748708
  %v77 = vextract.low.u32 %v76
  %v78 = vextract.high.u32 %v76
  %v79 = vshrl.u32 %v78, 4
  %v80 = vmul.u32 %v79, 18
  %v81 = vsub.s32 %v75, %v80
  %v82 = vsub.s32 0, %v81
  %v83 = vsel %vm73, %v82, %v81
  %vm84 = vcmp.lt.s32.totalorder %v49, 0
  %v85 = vsub.s32 0, %v49
  %v86 = vsel %vm84, %v85, %v49
  %v87 = vmul.u32.u64.compose %v86, 3817748708
  %v88 = vextract.low.u32 %v87
  %v89 = vextract.high.u32 %v87
  %v90 = vshrl.u32 %v89, 4
  %v91 = vmul.u32 %v90, 18
  %v92 = vsub.s32 %v86, %v91
  %v93 = vsub.s32 0, %v92
  %v94 = vsel %vm84, %v93, %v92
  %vm95 = vcmp.lt.s32.totalorder %v50, 0
  %v96 = vsub.s32 0, %v50
  %v97 = vsel %vm95, %v96, %v50
  %v98 = vmul.u32.u64.compose %v97, 3817748708
  %v99 = vextract.low.u32 %v98
  %v100 = vextract.high.u32 %v98
  %v101 = vshrl.u32 %v100, 4
  %v102 = vmul.u32 %v101, 18
  %v103 = vsub.s32 %v97, %v102
  %v104 = vsub.s32 0, %v103
  %v105 = vsel %vm95, %v104, %v103
  %vm106 = vcmp.ne.s32.totalorder %v61, 0
  %vm107 = vcmp.ne.s32.totalorder %v72, 0
  %vm108 = vcmp.ne.s32.totalorder %v83, 0
  %vm109 = vcmp.ne.s32.totalorder %v94, 0
  %vm110 = vcmp.ne.s32.totalorder %v105, 0
  %vm111 = vcmp.lt.s32.totalorder %v61, 0
  %vm112 = vcmp.lt.s32.totalorder %v72, 0
  %vm113 = vcmp.lt.s32.totalorder %v83, 0
  %vm114 = vcmp.lt.s32.totalorder %v94, 0
  %vm115 = vcmp.lt.s32.totalorder %v105, 0
  %vm116 = vmand %vm111, %vm106
  %vm117 = vmand %vm112, %vm107
  %vm118 = vmand %vm113, %vm108
  %vm119 = vmand %vm114, %vm109
  %vm120 = vmand %vm115, %vm110
  %v121 = vadd.s32 %v61, 18
  %v122 = vadd.s32 %v72, 18
  %v123 = vadd.s32 %v83, 18
  %v124 = vadd.s32 %v94, 18
  %v125 = vadd.s32 %v105, 18
  %v126 = vsel %vm116, %v121, %v61
  %v127 = vsel %vm117, %v122, %v72
  %v128 = vsel %vm118, %v123, %v83
  %v129 = vsel %vm119, %v124, %v94
  %v130 = vsel %vm120, %v125, %v105
  %vm131 = vcmp.lt.s32.totalorder %v126, 16
  %vm132 = vcmp.lt.s32.totalorder %v127, 16
  %vm133 = vcmp.lt.s32.totalorder %v128, 16
  %vm134 = vcmp.lt.s32.totalorder %v129, 16
  %vm135 = vcmp.lt.s32.totalorder %v130, 16
  %v136 = vsel %vm131, 1, 0
  %v137 = vsel %vm132, 1, 0
  %v138 = vsel %vm133, 1, 0
  %v139 = vsel %vm134, 1, 0
  %v140 = vsel %vm135, 1, 0
  %v141 = vcvt.s32.f32 %v136
  %v142 = vcvt.s32.f32 %v137
  %v143 = vcvt.s32.f32 %v138
  %v144 = vcvt.s32.f32 %v139
  %v145 = vcvt.s32.f32 %v140
  %v146 = vld [vmem:[#allocation2] sm:$0xff]
  %v147 = vld [vmem:[#allocation2 + $0x8] sm:$0xff]
  %v148 = vld [vmem:[#allocation2 + $0x10] sm:$0xff]
  %v149 = vld [vmem:[#allocation2 + $0x18] sm:$0xff]
  %v150 = vld [vmem:[#allocation2 + $0x20] sm:$0x3]
  %v151 = vpack.c.bf16 %v147, %v146
  %v152 = vpack.c.bf16 %v149, %v148
  %v153 = vpack.c.bf16 %v150, %v150
  %v154 = vld [vmem:[%s1] sm:$0xf]
  %v155 = vld [vmem:[%s1 + $0x4] sm:$0xf]
  %v156 = vld [vmem:[%s1 + $0x8] sm:$0xf]
  %v157 = vld [vmem:[%s1 + $0xc] sm:$0xf]
  %v158 = vld [vmem:[%s1 + $0x10] sm:$0xf]
  %v159 = vld [vmem:[%s1 + $0x14] sm:$0xf]
  %v160 = vld [vmem:[%s1 + $0x18] sm:$0xf]
  %v161 = vld [vmem:[%s1 + $0x1c] sm:$0xf]
  %v162 = vld [vmem:[%s1 + $0x20] sm:$0xf]
  %v163 = vld [vmem:[%s1 + $0x24] sm:$0xf]
  %v164 = vld [vmem:[%s1 + $0x28] sm:$0xf]
  %v165 = vld [vmem:[%s1 + $0x2c] sm:$0xf]
  %v166 = vld [vmem:[%s1 + $0x30] sm:$0xf]
  %v167 = vld [vmem:[%s1 + $0x34] sm:$0xf]
  %v168 = vld [vmem:[%s1 + $0x38] sm:$0xf]
  %v169 = vld [vmem:[%s1 + $0x3c] sm:$0xf]
  %v170 = vld [vmem:[#allocation2 + $0x1] sm:$0xff]
  %v171 = vld [vmem:[#allocation2 + $0x9] sm:$0xff]
  %v172 = vld [vmem:[#allocation2 + $0x11] sm:$0xff]
  %v173 = vld [vmem:[#allocation2 + $0x19] sm:$0xff]
  %v174 = vld [vmem:[#allocation2 + $0x21] sm:$0x3]
  %v175 = vpack.c.bf16 %v171, %v170
  %v176 = vpack.c.bf16 %v173, %v172
  %v177 = vpack.c.bf16 %v174, %v174
  %s178 = scalar_lea.vmem %s1, 64
  %v179 = vld [vmem:[%s178] sm:$0xf]
  %v180 = vld [vmem:[%s178 + $0x4] sm:$0xf]
  %v181 = vld [vmem:[%s178 + $0x8] sm:$0xf]
  %v182 = vld [vmem:[%s178 + $0xc] sm:$0xf]
  %v183 = vld [vmem:[%s178 + $0x10] sm:$0xf]
  %v184 = vld [vmem:[%s178 + $0x14] sm:$0xf]
  %v185 = vld [vmem:[%s178 + $0x18] sm:$0xf]
  %v186 = vld [vmem:[%s178 + $0x1c] sm:$0xf]
  %v187 = vld [vmem:[%s178 + $0x20] sm:$0xf]
  %v188 = vld [vmem:[%s178 + $0x24] sm:$0xf]
  %v189 = vld [vmem:[%s178 + $0x28] sm:$0xf]
  %v190 = vld [vmem:[%s178 + $0x2c] sm:$0xf]
  %v191 = vld [vmem:[%s178 + $0x30] sm:$0xf]
  %v192 = vld [vmem:[%s178 + $0x34] sm:$0xf]
  %v193 = vld [vmem:[%s178 + $0x38] sm:$0xf]
  %v194 = vld [vmem:[%s178 + $0x3c] sm:$0xf]
  %v211 = vunpack.c.l.b16 %v179
  %v212 = vunpack.c.l.b16 %v180
  %v213 = vunpack.c.l.b16 %v181
  %v214 = vunpack.c.l.b16 %v182
  %v215 = vunpack.c.l.b16 %v183
  %v216 = vunpack.c.l.b16 %v184
  %v217 = vunpack.c.l.b16 %v185
  %v218 = vunpack.c.l.b16 %v186
  %v219 = vunpack.c.l.b16 %v187
  %v220 = vunpack.c.l.b16 %v188
  %v221 = vunpack.c.l.b16 %v189
  %v222 = vunpack.c.l.b16 %v190
  %v223 = vunpack.c.l.b16 %v191
  %v224 = vunpack.c.l.b16 %v192
  %v225 = vunpack.c.l.b16 %v193
  %v226 = vunpack.c.l.b16 %v194
  %v227 = vpack.c.b16 %v212, %v211
  %v228 = vpack.c.b16 %v214, %v213
  %v229 = vpack.c.b16 %v216, %v215
  %v230 = vpack.c.b16 %v218, %v217
  %v231 = vpack.c.b16 %v220, %v219
  %v232 = vpack.c.b16 %v222, %v221
  %v233 = vpack.c.b16 %v224, %v223
  %v234 = vpack.c.b16 %v226, %v225
  %243 = vmatprep.subr.bf16.mxu0 0
  %244 = vmatpush1.bf16.msra.mxu0 %v227
  %245 = vmatprep.subr.bf16.mxu0 0
  %246 = vmatpush1.bf16.msra.mxu0 %v228
  %247 = vmatprep.subr.bf16.mxu0 0
  %248 = vmatpush1.bf16.msra.mxu0 %v229
  %249 = vmatprep.subr.bf16.mxu0 0
  %250 = vmatpush1.bf16.msra.mxu0 %v230
  %251 = vmatprep.subr.bf16.mxu0 0
  %252 = vmatpush1.bf16.msra.mxu0 %v231
  %253 = vmatprep.subr.bf16.mxu0 0
  %254 = vmatpush1.bf16.msra.mxu0 %v232
  %255 = vmatprep.subr.bf16.mxu0 0
  %256 = vmatpush1.bf16.msra.mxu0 %v233
  %257 = vmatprep.subr.bf16.mxu0 0
  %258 = vmatpush1.bf16.msra.mxu0 %v234
  %259 = vmatprep.subr.bf16.mxu0 0
  %260 = vmatpush1.bf16.msra.mxu0 0
  %261 = vmatprep.subr.bf16.mxu0 0
  %262 = vmatpush1.bf16.msra.mxu0 0
  %263 = vmatprep.subr.bf16.mxu0 0
  %264 = vmatpush1.bf16.msra.mxu0 0
  %265 = vmatprep.subr.bf16.mxu0 0
  %266 = vmatpush1.bf16.msra.mxu0 0
  %267 = vmatprep.subr.bf16.mxu0 0
  %268 = vmatpush1.bf16.msra.mxu0 0
  %269 = vmatprep.subr.bf16.mxu0 0
  %270 = vmatpush1.bf16.msra.mxu0 0
  %271 = vmatprep.subr.bf16.mxu0 0
  %272 = vmatpush1.bf16.msra.mxu0 0
  %273 = vmatprep.subr.bf16.mxu0 0
  %274 = vmatpush1.bf16.msra.mxu0 0
  %275 = vmatprep.mubr.bf16.mxu0 0
  %276 = vmatmul.mubr.bf16.gmra.mrb[0].mxu0 %v175
  %v277 = vpop.f32.mrb[0].mxu0
  %v278 = vadd.f32 0.0, %v277
  %v279 = vpop.f32.mrb[0].mxu0
  %v280 = vpop.f32.mrb[0].mxu0
  %v281 = vadd.f32 0.0, %v280
  %v282 = vpop.f32.mrb[0].mxu0
  %283 = vmatprep.mubr.bf16.mxu0 0
  %284 = vmatmul.mubr.bf16.gmra.mrb[0].mxu0 %v176
  %v285 = vpop.f32.mrb[0].mxu0
  %v286 = vadd.f32 0.0, %v285
  %v287 = vpop.f32.mrb[0].mxu0
  %v288 = vpop.f32.mrb[0].mxu0
  %v289 = vadd.f32 0.0, %v288
  %v290 = vpop.f32.mrb[0].mxu0
  %291 = vmatprep.mubr.bf16.mxu0 0
  %292 = vmatmul.mubr.bf16.gmra.mrb[0].mxu0 %v177
  %v293 = vpop.f32.mrb[0].mxu0
  %v294 = vadd.f32 0.0, %v293
  %v295 = vpop.f32.mrb[0].mxu0
  %v296 = vpop.f32.mrb[0].mxu0
  %v297 = vpop.f32.mrb[0].mxu0
  %298 = vdwg.mxu0
  %v315 = vunpack.c.l.b16 %v154
  %v316 = vunpack.c.l.b16 %v155
  %v317 = vunpack.c.l.b16 %v156
  %v318 = vunpack.c.l.b16 %v157
  %v319 = vunpack.c.l.b16 %v158
  %v320 = vunpack.c.l.b16 %v159
  %v321 = vunpack.c.l.b16 %v160
  %v322 = vunpack.c.l.b16 %v161
  %v323 = vunpack.c.l.b16 %v162
  %v324 = vunpack.c.l.b16 %v163
  %v325 = vunpack.c.l.b16 %v164
  %v326 = vunpack.c.l.b16 %v165
  %v327 = vunpack.c.l.b16 %v166
  %v328 = vunpack.c.l.b16 %v167
  %v329 = vunpack.c.l.b16 %v168
  %v330 = vunpack.c.l.b16 %v169
  %v331 = vpack.c.b16 %v316, %v315
  %v332 = vpack.c.b16 %v318, %v317
  %v333 = vpack.c.b16 %v320, %v319
  %v334 = vpack.c.b16 %v322, %v321
  %v335 = vpack.c.b16 %v324, %v323
  %v336 = vpack.c.b16 %v326, %v325
  %v337 = vpack.c.b16 %v328, %v327
  %v338 = vpack.c.b16 %v330, %v329
  %347 = vmatprep.subr.bf16.mxu0 0
  %348 = vmatpush1.bf16.msra.mxu0 %v331
  %349 = vmatprep.subr.bf16.mxu0 0
  %350 = vmatpush1.bf16.msra.mxu0 %v332
  %351 = vmatprep.subr.bf16.mxu0 0
  %352 = vmatpush1.bf16.msra.mxu0 %v333
  %353 = vmatprep.subr.bf16.mxu0 0
  %354 = vmatpush1.bf16.msra.mxu0 %v334
  %355 = vmatprep.subr.bf16.mxu0 0
  %356 = vmatpush1.bf16.msra.mxu0 %v335
  %357 = vmatprep.subr.bf16.mxu0 0
  %358 = vmatpush1.bf16.msra.mxu0 %v336
  %359 = vmatprep.subr.bf16.mxu0 0
  %360 = vmatpush1.bf16.msra.mxu0 %v337
  %361 = vmatprep.subr.bf16.mxu0 0
  %362 = vmatpush1.bf16.msra.mxu0 %v338
  %363 = vmatprep.subr.bf16.mxu0 0
  %364 = vmatpush1.bf16.msra.mxu0 0
  %365 = vmatprep.subr.bf16.mxu0 0
  %366 = vmatpush1.bf16.msra.mxu0 0
  %367 = vmatprep.subr.bf16.mxu0 0
  %368 = vmatpush1.bf16.msra.mxu0 0
  %369 = vmatprep.subr.bf16.mxu0 0
  %370 = vmatpush1.bf16.msra.mxu0 0
  %371 = vmatprep.subr.bf16.mxu0 0
  %372 = vmatpush1.bf16.msra.mxu0 0
  %373 = vmatprep.subr.bf16.mxu0 0
  %374 = vmatpush1.bf16.msra.mxu0 0
  %375 = vmatprep.subr.bf16.mxu0 0
  %376 = vmatpush1.bf16.msra.mxu0 0
  %377 = vmatprep.subr.bf16.mxu0 0
  %378 = vmatpush1.bf16.msra.mxu0 0
  %379 = vmatprep.mubr.bf16.mxu0 0
  %380 = vmatmul.mubr.bf16.gmra.mrb[0].mxu0 %v151
  %v381 = vpop.f32.mrb[0].mxu0
  %v382 = vadd.f32 %v278, %v381
  %v383 = vpop.f32.mrb[0].mxu0
  %v384 = vpop.f32.mrb[0].mxu0
  %v385 = vadd.f32 %v281, %v384
  %v386 = vpop.f32.mrb[0].mxu0
  %387 = vmatprep.mubr.bf16.mxu0 0
  %388 = vmatmul.mubr.bf16.gmra.mrb[0].mxu0 %v152
  %v389 = vpop.f32.mrb[0].mxu0
  %v390 = vadd.f32 %v286, %v389
  %v391 = vpop.f32.mrb[0].mxu0
  %v392 = vpop.f32.mrb[0].mxu0
  %v393 = vadd.f32 %v289, %v392
  %v394 = vpop.f32.mrb[0].mxu0
  %395 = vmatprep.mubr.bf16.mxu0 0
  %396 = vmatmul.mubr.bf16.gmra.mrb[0].mxu0 %v153
  %v397 = vpop.f32.mrb[0].mxu0
  %v398 = vadd.f32 %v294, %v397
  %v399 = vpop.f32.mrb[0].mxu0
  %v400 = vpop.f32.mrb[0].mxu0
  %v401 = vpop.f32.mrb[0].mxu0
  %402 = vdwg.mxu0
  %v403 = vld [vmem:[#allocation2 + $0x2] sm:$0xff]
  %v404 = vld [vmem:[#allocation2 + $0xa] sm:$0xff]
  %v405 = vld [vmem:[#allocation2 + $0x12] sm:$0xff]
  %v406 = vld [vmem:[#allocation2 + $0x1a] sm:$0xff]
  %v407 = vld [vmem:[#allocation2 + $0x22] sm:$0x3]
  %v408 = vpack.c.bf16 %v404, %v403
  %v409 = vpack.c.bf16 %v406, %v405
  %v410 = vpack.c.bf16 %v407, %v407
  %s411 = scalar_lea.vmem %s1, 128
  %v412 = vld [vmem:[%s411] sm:$0xf]
  %v413 = vld [vmem:[%s411 + $0x4] sm:$0xf]
  %v414 = vld [vmem:[%s411 + $0x8] sm:$0xf]
  %v415 = vld [vmem:[%s411 + $0xc] sm:$0xf]
  %v416 = vld [vmem:[%s411 + $0x10] sm:$0xf]
  %v417 = vld [vmem:[%s411 + $0x14] sm:$0xf]
  %v418 = vld [vmem:[%s411 + $0x18] sm:$0xf]
  %v419 = vld [vmem:[%s411 + $0x1c] sm:$0xf]
  %v420 = vld [vmem:[%s411 + $0x20] sm:$0xf]
  %v421 = vld [vmem:[%s411 + $0x24] sm:$0xf]
  %v422 = vld [vmem:[%s411 + $0x28] sm:$0xf]
  %v423 = vld [vmem:[%s411 + $0x2c] sm:$0xf]
  %v424 = vld [vmem:[%s411 + $0x30] sm:$0xf]
  %v425 = vld [vmem:[%s411 + $0x34] sm:$0xf]
  %v426 = vld [vmem:[%s411 + $0x38] sm:$0xf]
  %v427 = vld [vmem:[%s411 + $0x3c] sm:$0xf]
  %v444 = vunpack.c.l.b16 %v412
  %v445 = vunpack.c.l.b16 %v413
  %v446 = vunpack.c.l.b16 %v414
  %v447 = vunpack.c.l.b16 %v415
  %v448 = vunpack.c.l.b16 %v416
  %v449 = vunpack.c.l.b16 %v417
  %v450 = vunpack.c.l.b16 %v418
  %v451 = vunpack.c.l.b16 %v419
  %v452 = vunpack.c.l.b16 %v420
  %v453 = vunpack.c.l.b16 %v421
  %v454 = vunpack.c.l.b16 %v422
  %v455 = vunpack.c.l.b16 %v423
  %v456 = vunpack.c.l.b16 %v424
  %v457 = vunpack.c.l.b16 %v425
  %v458 = vunpack.c.l.b16 %v426
  %v459 = vunpack.c.l.b16 %v427
  %v460 = vpack.c.b16 %v445, %v444
  %v461 = vpack.c.b16 %v447, %v446
  %v462 = vpack.c.b16 %v449, %v448
  %v463 = vpack.c.b16 %v451, %v450
  %v464 = vpack.c.b16 %v453, %v452
  %v465 = vpack.c.b16 %v455, %v454
  %v466 = vpack.c.b16 %v457, %v456
  %v467 = vpack.c.b16 %v459, %v458
  %476 = vmatprep.subr.bf16.mxu0 0
  %477 = vmatpush1.bf16.msra.mxu0 %v460
  %478 = vmatprep.subr.bf16.mxu0 0
  %479 = vmatpush1.bf16.msra.mxu0 %v461
  %480 = vmatprep.subr.bf16.mxu0 0
  %481 = vmatpush1.bf16.msra.mxu0 %v462
  %482 = vmatprep.subr.bf16.mxu0 0
  %483 = vmatpush1.bf16.msra.mxu0 %v463
  %484 = vmatprep.subr.bf16.mxu0 0
  %485 = vmatpush1.bf16.msra.mxu0 %v464
  %486 = vmatprep.subr.bf16.mxu0 0
  %487 = vmatpush1.bf16.msra.mxu0 %v465
  %488 = vmatprep.subr.bf16.mxu0 0
  %489 = vmatpush1.bf16.msra.mxu0 %v466
  %490 = vmatprep.subr.bf16.mxu0 0
  %491 = vmatpush1.bf16.msra.mxu0 %v467
  %492 = vmatprep.subr.bf16.mxu0 0
  %493 = vmatpush1.bf16.msra.mxu0 0
  %494 = vmatprep.subr.bf16.mxu0 0
  %495 = vmatpush1.bf16.msra.mxu0 0
  %496 = vmatprep.subr.bf16.mxu0 0
  %497 = vmatpush1.bf16.msra.mxu0 0
  %498 = vmatprep.subr.bf16.mxu0 0
  %499 = vmatpush1.bf16.msra.mxu0 0
  %500 = vmatprep.subr.bf16.mxu0 0
  %501 = vmatpush1.bf16.msra.mxu0 0
  %502 = vmatprep.subr.bf16.mxu0 0
  %503 = vmatpush1.bf16.msra.mxu0 0
  %504 = vmatprep.subr.bf16.mxu0 0
  %505 = vmatpush1.bf16.msra.mxu0 0
  %506 = vmatprep.subr.bf16.mxu0 0
  %507 = vmatpush1.bf16.msra.mxu0 0
  %508 = vmatprep.mubr.bf16.mxu0 0
  %509 = vmatmul.mubr.bf16.gmra.mrb[0].mxu0 %v408
  %v510 = vpop.f32.mrb[0].mxu0
  %v511 = vadd.f32 0.0, %v510
  %v512 = vpop.f32.mrb[0].mxu0
  %v513 = vpop.f32.mrb[0].mxu0
  %v514 = vadd.f32 0.0, %v513
  %v515 = vpop.f32.mrb[0].mxu0
  %516 = vmatprep.mubr.bf16.mxu0 0
  %517 = vmatmul.mubr.bf16.gmra.mrb[0].mxu0 %v409
  %v518 = vpop.f32.mrb[0].mxu0
  %v519 = vadd.f32 0.0, %v518
  %v520 = vpop.f32.mrb[0].mxu0
  %v521 = vpop.f32.mrb[0].mxu0
  %v522 = vadd.f32 0.0, %v521
  %v523 = vpop.f32.mrb[0].mxu0
  %524 = vmatprep.mubr.bf16.mxu0 0
  %525 = vmatmul.mubr.bf16.gmra.mrb[0].mxu0 %v410
  %v526 = vpop.f32.mrb[0].mxu0
  %v527 = vadd.f32 0.0, %v526
  %v528 = vpop.f32.mrb[0].mxu0
  %v529 = vpop.f32.mrb[0].mxu0
  %v530 = vpop.f32.mrb[0].mxu0
  %531 = vdwg.mxu0
  %v532 = vadd.f32 %v382, %v511
  %v533 = vadd.f32 %v385, %v514
  %v534 = vadd.f32 %v390, %v519
  %v535 = vadd.f32 %v393, %v522
  %v536 = vadd.f32 %v398, %v527
  %v537 = vmul.f32 %v532, %v141
  %v538 = vmul.f32 %v533, %v142
  %v539 = vmul.f32 %v534, %v143
  %v540 = vmul.f32 %v535, %v144
  %v541 = vmul.f32 %v536, %v145
  %v542 = vadd.f32 %v537, %v538
  %v543 = vadd.f32 %v542, %v539
  %v544 = vadd.f32 %v543, %v540
  %vm545 = vcmask 1041408
  %v546 = vsel %vm545, %v541, 0.0
  %v547 = vadd.f32 %v544, %v546
  %v548 = vrot.slane %v547, 4
  %v549 = vadd.f32 %v547, %v548
  %v550 = vrot.slane %v549, 2
  %v551 = vadd.f32 %v549, %v550
  %v552 = vrot.slane %v551, 1
  %v553 = vadd.f32 %v551, %v552
  %v554 = vmul.f32 %v532, %v532
  %v555 = vmul.f32 %v533, %v533
  %v556 = vmul.f32 %v534, %v534
  %v557 = vmul.f32 %v535, %v535
  %v558 = vmul.f32 %v536, %v536
  %v559 = vmul.f32 %v554, %v141
  %v560 = vmul.f32 %v555, %v142
  %v561 = vmul.f32 %v556, %v143
  %v562 = vmul.f32 %v557, %v144
  %v563 = vmul.f32 %v558, %v145
  %v564 = vadd.f32 %v559, %v560
  %v565 = vadd.f32 %v564, %v561
  %v566 = vadd.f32 %v565, %v562
  %v567 = vsel %vm545, %v563, 0.0
  %v568 = vadd.f32 %v566, %v567
  %v569 = vrot.slane %v568, 4
  %v570 = vadd.f32 %v568, %v569
  %v571 = vrot.slane %v570, 2
  %v572 = vadd.f32 %v570, %v571
  %v573 = vrot.slane %v572, 1
  %v574 = vadd.f32 %v572, %v573
  %vm575 = vcmask 1040384
  %v576 = vsel %vm575, %v553, %v574
  %v577 = vld [vmem:[%s7] sm:$0xff]
  %v578 = vld [vmem:[%s7 + $0x8] sm:$0xff]
  %v579 = vld [vmem:[%s7 + $0x10] sm:$0xff]
  %v580 = vld [vmem:[%s7 + $0x18] sm:$0xff]
  %v581 = vld [vmem:[%s7 + $0x20] sm:$0xff]
  %v582 = vld [vmem:[%s7 + $0x28] sm:$0xff]
  %v583 = vld [vmem:[%s7 + $0x30] sm:$0xff]
  %v584 = vld [vmem:[%s7 + $0x38] sm:$0xff]
  %v585 = vld [vmem:[%s7 + $0x40] sm:$0xff]
  %v586 = vld [vmem:[%s7 + $0x48] sm:$0xff]
  %v587 = vld [vmem:[%s7 + $0x50] sm:$0xff]
  %v588 = vld [vmem:[%s7 + $0x58] sm:$0xff]
  %v589 = vld [vmem:[%s7 + $0x60] sm:$0xff]
  %v590 = vld [vmem:[%s7 + $0x68] sm:$0xff]
  %v591 = vld [vmem:[%s7 + $0x70] sm:$0xff]
  %v592 = vld [vmem:[%s7 + $0x78] sm:$0xff]
  %593 = vmatprep.subr.mxu0 0.0
  %594 = vmatpush1.msra.mxu0 %v577
  %595 = vmatprep.subr.mxu0 0.0
  %596 = vmatpush1.msra.mxu0 %v578
  %597 = vmatprep.subr.mxu0 0.0
  %598 = vmatpush1.msra.mxu0 %v579
  %599 = vmatprep.subr.mxu0 0.0
  %600 = vmatpush1.msra.mxu0 %v580
  %601 = vmatprep.subr.mxu0 0.0
  %602 = vmatpush1.msra.mxu0 %v581
  %603 = vmatprep.subr.mxu0 0.0
  %604 = vmatpush1.msra.mxu0 %v582
  %605 = vmatprep.subr.mxu0 0.0
  %606 = vmatpush1.msra.mxu0 %v583
  %607 = vmatprep.subr.mxu0 0.0
  %608 = vmatpush1.msra.mxu0 %v584
  %609 = vmatprep.subr.mxu0 0.0
  %610 = vmatpush1.msra.mxu0 %v585
  %611 = vmatprep.subr.mxu0 0.0
  %612 = vmatpush1.msra.mxu0 %v586
  %613 = vmatprep.subr.mxu0 0.0
  %614 = vmatpush1.msra.mxu0 %v587
  %615 = vmatprep.subr.mxu0 0.0
  %616 = vmatpush1.msra.mxu0 %v588
  %617 = vmatprep.subr.mxu0 0.0
  %618 = vmatpush1.msra.mxu0 %v589
  %619 = vmatprep.subr.mxu0 0.0
  %620 = vmatpush1.msra.mxu0 %v590
  %621 = vmatprep.subr.mxu0 0.0
  %622 = vmatpush1.msra.mxu0 %v591
  %623 = vmatprep.subr.mxu0 0.0
  %624 = vmatpush1.msra.mxu0 %v592
  %625 = vmatprep.subr.mxu0 0.0
  %626 = vmatpush1.msra.mxu0 0.0
  %627 = vmatprep.subr.mxu0 0.0
  %628 = vmatpush1.msra.mxu0 0.0
  %629 = vmatprep.subr.mxu0 0.0
  %630 = vmatpush1.msra.mxu0 0.0
  %631 = vmatprep.subr.mxu0 0.0
  %632 = vmatpush1.msra.mxu0 0.0
  %633 = vmatprep.subr.mxu0 0.0
  %634 = vmatpush1.msra.mxu0 0.0
  %635 = vmatprep.subr.mxu0 0.0
  %636 = vmatpush1.msra.mxu0 0.0
  %637 = vmatprep.subr.mxu0 0.0
  %638 = vmatpush1.msra.mxu0 0.0
  %639 = vmatprep.subr.mxu0 0.0
  %640 = vmatpush1.msra.mxu0 0.0
  %641 = vmatprep.subr.mxu0 0.0
  %642 = vmatpush1.msra.mxu0 0.0
  %643 = vmatprep.subr.mxu0 0.0
  %644 = vmatpush1.msra.mxu0 0.0
  %645 = vmatprep.subr.mxu0 0.0
  %646 = vmatpush1.msra.mxu0 0.0
  %647 = vmatprep.subr.mxu0 0.0
  %648 = vmatpush1.msra.mxu0 0.0
  %649 = vmatprep.subr.mxu0 0.0
  %650 = vmatpush1.msra.mxu0 0.0
  %651 = vmatprep.subr.mxu0 0.0
  %652 = vmatpush1.msra.mxu0 0.0
  %653 = vmatprep.subr.mxu0 0.0
  %654 = vmatpush1.msra.mxu0 0.0
  %655 = vmatprep.subr.mxu0 0.0
  %656 = vmatpush1.msra.mxu0 0.0
  %657 = vmatprep.mubr.f32.mxu0 0.0
  %658 = vmatmul.mubr.f32.gmra.mrb[0].mxu0 %v576
  %v659 = vpop.f32.mrb[0].mxu0
  %v660 = vadd.f32 0.0, %v659
  %v661 = vpop.f32.mrb[0].mxu0
  %662 = vdwg.mxu0
  %v663 = vmul.f32 %v660, 0.001953125
  %v664 = vmul.f32 %v663, %v663
  %v666 = vrot.slane %v664, 7
  %v668 = vsub.f32 %v663, %v666
  %v669 = vld [vmem:[%s2] sm:$0x1]
  %v670 = vadd.f32 %v668, 1e-05
  %v671 = vrsqrt.pop %v670
  %v674 = vunpack.c.l.s4 1966171168
  %v675 = vunpack.c.0.s8 %v674
  %v676 = vlaneseq
  %v677 = vshrl.u32 %v676, 7
  %v678 = vsub.s32 %v675, %v677
  %v679 = vrot.slane %v671, %v678
  %v680 = vcombine.high %v679, %v679
  %v682 = vunpack.c.l.s4 1966171168
  %v683 = vunpack.c.0.s8 %v682
  %v684 = vlaneseq
  %v685 = vshrl.u32 %v684, 7
  %v686 = vsub.s32 %v683, %v685
  %v687 = vrot.slane %v680, %v686
  %v689 = vmul.f32 %v669, %v687
  %v690 = vld [vmem:[%s3] sm:$0x1]
  %v691 = vmul.f32 %v663, %v689
  %v692 = vsub.f32 %v690, %v691
  %v694 = vlaneseq
  %v695 = vshrl.u32 %v694, 7
  %v696 = vsub.s32 0, %v695
  %v697 = vrot.slane %v692, %v696
  %v699 = vsel %vm575, %v689, %v697
  %v700 = vld [vmem:[%s8] sm:$0xff]
  %vm701 = vcmask 64512
  %v703 = vsel %vm701, %v699, 0
  %705 = vmatprep.subr.mxu0 0.0
  %706 = vmatpush1.msra.mxu0 %v700
  %707 = vmatprep.subr.mxu0 0.0
  %708 = vmatpush1.msra.mxu0 0.0
  %709 = vmatprep.subr.mxu0 0.0
  %710 = vmatpush1.msra.mxu0 0.0
  %711 = vmatprep.subr.mxu0 0.0
  %712 = vmatpush1.msra.mxu0 0.0
  %713 = vmatprep.subr.mxu0 0.0
  %714 = vmatpush1.msra.mxu0 0.0
  %715 = vmatprep.subr.mxu0 0.0
  %716 = vmatpush1.msra.mxu0 0.0
  %717 = vmatprep.subr.mxu0 0.0
  %718 = vmatpush1.msra.mxu0 0.0
  %719 = vmatprep.subr.mxu0 0.0
  %720 = vmatpush1.msra.mxu0 0.0
  %721 = vmatprep.subr.mxu0 0.0
  %722 = vmatpush1.msra.mxu0 0.0
  %723 = vmatprep.subr.mxu0 0.0
  %724 = vmatpush1.msra.mxu0 0.0
  %725 = vmatprep.subr.mxu0 0.0
  %726 = vmatpush1.msra.mxu0 0.0
  %727 = vmatprep.subr.mxu0 0.0
  %728 = vmatpush1.msra.mxu0 0.0
  %729 = vmatprep.subr.mxu0 0.0
  %730 = vmatpush1.msra.mxu0 0.0
  %731 = vmatprep.subr.mxu0 0.0
  %732 = vmatpush1.msra.mxu0 0.0
  %733 = vmatprep.subr.mxu0 0.0
  %734 = vmatpush1.msra.mxu0 0.0
  %735 = vmatprep.subr.mxu0 0.0
  %736 = vmatpush1.msra.mxu0 0.0
  %737 = vmatprep.subr.mxu0 0.0
  %738 = vmatpush1.msra.mxu0 0.0
  %739 = vmatprep.subr.mxu0 0.0
  %740 = vmatpush1.msra.mxu0 0.0
  %741 = vmatprep.subr.mxu0 0.0
  %742 = vmatpush1.msra.mxu0 0.0
  %743 = vmatprep.subr.mxu0 0.0
  %744 = vmatpush1.msra.mxu0 0.0
  %745 = vmatprep.subr.mxu0 0.0
  %746 = vmatpush1.msra.mxu0 0.0
  %747 = vmatprep.subr.mxu0 0.0
  %748 = vmatpush1.msra.mxu0 0.0
  %749 = vmatprep.subr.mxu0 0.0
  %750 = vmatpush1.msra.mxu0 0.0
  %751 = vmatprep.subr.mxu0 0.0
  %752 = vmatpush1.msra.mxu0 0.0
  %753 = vmatprep.subr.mxu0 0.0
  %754 = vmatpush1.msra.mxu0 0.0
  %755 = vmatprep.subr.mxu0 0.0
  %756 = vmatpush1.msra.mxu0 0.0
  %757 = vmatprep.subr.mxu0 0.0
  %758 = vmatpush1.msra.mxu0 0.0
  %759 = vmatprep.subr.mxu0 0.0
  %760 = vmatpush1.msra.mxu0 0.0
  %761 = vmatprep.subr.mxu0 0.0
  %762 = vmatpush1.msra.mxu0 0.0
  %763 = vmatprep.subr.mxu0 0.0
  %764 = vmatpush1.msra.mxu0 0.0
  %765 = vmatprep.subr.mxu0 0.0
  %766 = vmatpush1.msra.mxu0 0.0
  %767 = vmatprep.subr.mxu0 0.0
  %768 = vmatpush1.msra.mxu0 0.0
  %769 = vmatprep.mubr.f32.mxu0 0.0
  %770 = vmatmul.mubr.f32.gmra.mrb[0].mxu0 %v703
  %v771 = vpop.f32.mrb[0].mxu0
  %v772 = vadd.f32 0.0, %v771
  %v773 = vpop.f32.mrb[0].mxu0
  %774 = vdwg.mxu0
  %v775 = vlaneseq
  %v776 = vshrl.u32 %v775, 7
  %v777 = vsub.s32 0, %v776
  %v778 = vrot.slane %v772, %v777
  %v779 = vmul.f32 %v532, %v778
  %v780 = vmul.f32 %v533, %v778
  %v781 = vlaneseq
  %v782 = vshrl.u32 %v781, 7
  %v783 = vsub.s32 1, %v782
  %v784 = vrot.slane %v772, %v783
  %v785 = vadd.f32 %v779, %v784
  %v786 = vadd.f32 %v780, %v784
  %vm787 = vcmp.gt.f32.partialorder %v785, 0.0
  %vm788 = vcmp.gt.f32.partialorder %v786, 0.0
  %v789 = vmul.f32 %v785, 0.2
  %v790 = vmul.f32 %v786, 0.2
  %v791 = vsel %vm787, %v785, %v789
  %v792 = vsel %vm788, %v786, %v790
  %793 = vst [vmem:[#allocation2 + $0x1] sm:$0xff] %v791
  %794 = vst [vmem:[#allocation2 + $0x9] sm:$0xff] %v792
  %v795 = vmul.f32 %v534, %v778
  %v796 = vmul.f32 %v535, %v778
  %v797 = vmul.f32 %v536, %v778
  %v798 = vadd.f32 %v795, %v784
  %v799 = vadd.f32 %v796, %v784
  %v800 = vadd.f32 %v797, %v784
  %vm801 = vcmp.gt.f32.partialorder %v798, 0.0
  %vm802 = vcmp.gt.f32.partialorder %v799, 0.0
  %vm803 = vcmp.gt.f32.partialorder %v800, 0.0
  %v804 = vmul.f32 %v798, 0.2
  %v805 = vmul.f32 %v799, 0.2
  %v806 = vmul.f32 %v800, 0.2
  %v807 = vsel %vm801, %v798, %v804
  %v808 = vsel %vm802, %v799, %v805
  %v809 = vsel %vm803, %v800, %v806
  %810 = vst [vmem:[#allocation2 + $0x11] sm:$0xfc] %v807
  %811 = vst [vmem:[#allocation2 + $0x19] sm:$0xff] %v808
  %812 = vst [vmem:[#allocation2 + $0x21] sm:$0x3] %v809
  %v813 = vld [vmem:[#allocation2] sm:$0xff]
  %v814 = vld [vmem:[#allocation2 + $0x8] sm:$0xff]
  %v815 = vld [vmem:[#allocation2 + $0x10] sm:$0xff]
  %v816 = vld [vmem:[#allocation2 + $0x18] sm:$0xff]
  %v817 = vld [vmem:[#allocation2 + $0x20] sm:$0x3]
  %v818 = vpack.c.bf16 %v814, %v813
  %v819 = vpack.c.bf16 %v816, %v815
  %v820 = vpack.c.bf16 %v817, %v817
  %v821 = vld [vmem:[%s4] sm:$0xf]
  %v822 = vld [vmem:[%s4 + $0x4] sm:$0xf]
  %v823 = vld [vmem:[%s4 + $0x8] sm:$0xf]
  %v824 = vld [vmem:[%s4 + $0xc] sm:$0xf]
  %v825 = vld [vmem:[%s4 + $0x10] sm:$0xf]
  %v826 = vld [vmem:[%s4 + $0x14] sm:$0xf]
  %v827 = vld [vmem:[%s4 + $0x18] sm:$0xf]
  %v828 = vld [vmem:[%s4 + $0x1c] sm:$0xf]
  %v829 = vld [vmem:[%s4 + $0x20] sm:$0xf]
  %v830 = vld [vmem:[%s4 + $0x24] sm:$0xf]
  %v831 = vld [vmem:[%s4 + $0x28] sm:$0xf]
  %v832 = vld [vmem:[%s4 + $0x2c] sm:$0xf]
  %v833 = vld [vmem:[%s4 + $0x30] sm:$0xf]
  %v834 = vld [vmem:[%s4 + $0x34] sm:$0xf]
  %v835 = vld [vmem:[%s4 + $0x38] sm:$0xf]
  %v836 = vld [vmem:[%s4 + $0x3c] sm:$0xf]
  %v837 = vld [vmem:[#allocation2 + $0x1] sm:$0xff]
  %v838 = vld [vmem:[#allocation2 + $0x9] sm:$0xff]
  %v839 = vld [vmem:[#allocation2 + $0x11] sm:$0xff]
  %v840 = vld [vmem:[#allocation2 + $0x19] sm:$0xff]
  %v841 = vld [vmem:[#allocation2 + $0x21] sm:$0x3]
  %v842 = vpack.c.bf16 %v838, %v837
  %v843 = vpack.c.bf16 %v840, %v839
  %v844 = vpack.c.bf16 %v841, %v841
  %s845 = scalar_lea.vmem %s4, 64
  %v846 = vld [vmem:[%s845] sm:$0xf]
  %v847 = vld [vmem:[%s845 + $0x4] sm:$0xf]
  %v848 = vld [vmem:[%s845 + $0x8] sm:$0xf]
  %v849 = vld [vmem:[%s845 + $0xc] sm:$0xf]
  %v850 = vld [vmem:[%s845 + $0x10] sm:$0xf]
  %v851 = vld [vmem:[%s845 + $0x14] sm:$0xf]
  %v852 = vld [vmem:[%s845 + $0x18] sm:$0xf]
  %v853 = vld [vmem:[%s845 + $0x1c] sm:$0xf]
  %v854 = vld [vmem:[%s845 + $0x20] sm:$0xf]
  %v855 = vld [vmem:[%s845 + $0x24] sm:$0xf]
  %v856 = vld [vmem:[%s845 + $0x28] sm:$0xf]
  %v857 = vld [vmem:[%s845 + $0x2c] sm:$0xf]
  %v858 = vld [vmem:[%s845 + $0x30] sm:$0xf]
  %v859 = vld [vmem:[%s845 + $0x34] sm:$0xf]
  %v860 = vld [vmem:[%s845 + $0x38] sm:$0xf]
  %v861 = vld [vmem:[%s845 + $0x3c] sm:$0xf]
  %v878 = vunpack.c.l.b16 %v846
  %v879 = vunpack.c.l.b16 %v847
  %v880 = vunpack.c.l.b16 %v848
  %v881 = vunpack.c.l.b16 %v849
  %v882 = vunpack.c.l.b16 %v850
  %v883 = vunpack.c.l.b16 %v851
  %v884 = vunpack.c.l.b16 %v852
  %v885 = vunpack.c.l.b16 %v853
  %v886 = vunpack.c.l.b16 %v854
  %v887 = vunpack.c.l.b16 %v855
  %v888 = vunpack.c.l.b16 %v856
  %v889 = vunpack.c.l.b16 %v857
  %v890 = vunpack.c.l.b16 %v858
  %v891 = vunpack.c.l.b16 %v859
  %v892 = vunpack.c.l.b16 %v860
  %v893 = vunpack.c.l.b16 %v861
  %v894 = vpack.c.b16 %v879, %v878
  %v895 = vpack.c.b16 %v881, %v880
  %v896 = vpack.c.b16 %v883, %v882
  %v897 = vpack.c.b16 %v885, %v884
  %v898 = vpack.c.b16 %v887, %v886
  %v899 = vpack.c.b16 %v889, %v888
  %v900 = vpack.c.b16 %v891, %v890
  %v901 = vpack.c.b16 %v893, %v892
  %910 = vmatprep.subr.bf16.mxu0 0
  %911 = vmatpush1.bf16.msra.mxu0 %v894
  %912 = vmatprep.subr.bf16.mxu0 0
  %913 = vmatpush1.bf16.msra.mxu0 %v895
  %914 = vmatprep.subr.bf16.mxu0 0
  %915 = vmatpush1.bf16.msra.mxu0 %v896
  %916 = vmatprep.subr.bf16.mxu0 0
  %917 = vmatpush1.bf16.msra.mxu0 %v897
  %918 = vmatprep.subr.bf16.mxu0 0
  %919 = vmatpush1.bf16.msra.mxu0 %v898
  %920 = vmatprep.subr.bf16.mxu0 0
  %921 = vmatpush1.bf16.msra.mxu0 %v899
  %922 = vmatprep.subr.bf16.mxu0 0
  %923 = vmatpush1.bf16.msra.mxu0 %v900
  %924 = vmatprep.subr.bf16.mxu0 0
  %925 = vmatpush1.bf16.msra.mxu0 %v901
  %926 = vmatprep.subr.bf16.mxu0 0
  %927 = vmatpush1.bf16.msra.mxu0 0
  %928 = vmatprep.subr.bf16.mxu0 0
  %929 = vmatpush1.bf16.msra.mxu0 0
  %930 = vmatprep.subr.bf16.mxu0 0
  %931 = vmatpush1.bf16.msra.mxu0 0
  %932 = vmatprep.subr.bf16.mxu0 0
  %933 = vmatpush1.bf16.msra.mxu0 0
  %934 = vmatprep.subr.bf16.mxu0 0
  %935 = vmatpush1.bf16.msra.mxu0 0
  %936 = vmatprep.subr.bf16.mxu0 0
  %937 = vmatpush1.bf16.msra.mxu0 0
  %938 = vmatprep.subr.bf16.mxu0 0
  %939 = vmatpush1.bf16.msra.mxu0 0
  %940 = vmatprep.subr.bf16.mxu0 0
  %941 = vmatpush1.bf16.msra.mxu0 0
  %942 = vmatprep.mubr.bf16.mxu0 0
  %943 = vmatmul.mubr.bf16.gmra.mrb[0].mxu0 %v842
  %v944 = vpop.f32.mrb[0].mxu0
  %v945 = vadd.f32 0.0, %v944
  %v946 = vpop.f32.mrb[0].mxu0
  %v947 = vpop.f32.mrb[0].mxu0
  %v948 = vadd.f32 0.0, %v947
  %v949 = vpop.f32.mrb[0].mxu0
  %950 = vmatprep.mubr.bf16.mxu0 0
  %951 = vmatmul.mubr.bf16.gmra.mrb[0].mxu0 %v843
  %v952 = vpop.f32.mrb[0].mxu0
  %v953 = vadd.f32 0.0, %v952
  %v954 = vpop.f32.mrb[0].mxu0
  %v955 = vpop.f32.mrb[0].mxu0
  %v956 = vadd.f32 0.0, %v955
  %v957 = vpop.f32.mrb[0].mxu0
  %958 = vmatprep.mubr.bf16.mxu0 0
  %959 = vmatmul.mubr.bf16.gmra.mrb[0].mxu0 %v844
  %v960 = vpop.f32.mrb[0].mxu0
  %v961 = vadd.f32 0.0, %v960
  %v962 = vpop.f32.mrb[0].mxu0
  %v963 = vpop.f32.mrb[0].mxu0
  %v964 = vpop.f32.mrb[0].mxu0
  %965 = vdwg.mxu0
  %v982 = vunpack.c.l.b16 %v821
  %v983 = vunpack.c.l.b16 %v822
  %v984 = vunpack.c.l.b16 %v823
  %v985 = vunpack.c.l.b16 %v824
  %v986 = vunpack.c.l.b16 %v825
  %v987 = vunpack.c.l.b16 %v826
  %v988 = vunpack.c.l.b16 %v827
  %v989 = vunpack.c.l.b16 %v828
  %v990 = vunpack.c.l.b16 %v829
  %v991 = vunpack.c.l.b16 %v830
  %v992 = vunpack.c.l.b16 %v831
  %v993 = vunpack.c.l.b16 %v832
  %v994 = vunpack.c.l.b16 %v833
  %v995 = vunpack.c.l.b16 %v834
  %v996 = vunpack.c.l.b16 %v835
  %v997 = vunpack.c.l.b16 %v836
  %v998 = vpack.c.b16 %v983, %v982
  %v999 = vpack.c.b16 %v985, %v984
  %v1000 = vpack.c.b16 %v987, %v986
  %v1001 = vpack.c.b16 %v989, %v988
  %v1002 = vpack.c.b16 %v991, %v990
  %v1003 = vpack.c.b16 %v993, %v992
  %v1004 = vpack.c.b16 %v995, %v994
  %v1005 = vpack.c.b16 %v997, %v996
  %1014 = vmatprep.subr.bf16.mxu0 0
  %1015 = vmatpush1.bf16.msra.mxu0 %v998
  %1016 = vmatprep.subr.bf16.mxu0 0
  %1017 = vmatpush1.bf16.msra.mxu0 %v999
  %1018 = vmatprep.subr.bf16.mxu0 0
  %1019 = vmatpush1.bf16.msra.mxu0 %v1000
  %1020 = vmatprep.subr.bf16.mxu0 0
  %1021 = vmatpush1.bf16.msra.mxu0 %v1001
  %1022 = vmatprep.subr.bf16.mxu0 0
  %1023 = vmatpush1.bf16.msra.mxu0 %v1002
  %1024 = vmatprep.subr.bf16.mxu0 0
  %1025 = vmatpush1.bf16.msra.mxu0 %v1003
  %1026 = vmatprep.subr.bf16.mxu0 0
  %1027 = vmatpush1.bf16.msra.mxu0 %v1004
  %1028 = vmatprep.subr.bf16.mxu0 0
  %1029 = vmatpush1.bf16.msra.mxu0 %v1005
  %1030 = vmatprep.subr.bf16.mxu0 0
  %1031 = vmatpush1.bf16.msra.mxu0 0
  %1032 = vmatprep.subr.bf16.mxu0 0
  %1033 = vmatpush1.bf16.msra.mxu0 0
  %1034 = vmatprep.subr.bf16.mxu0 0
  %1035 = vmatpush1.bf16.msra.mxu0 0
  %1036 = vmatprep.subr.bf16.mxu0 0
  %1037 = vmatpush1.bf16.msra.mxu0 0
  %1038 = vmatprep.subr.bf16.mxu0 0
  %1039 = vmatpush1.bf16.msra.mxu0 0
  %1040 = vmatprep.subr.bf16.mxu0 0
  %1041 = vmatpush1.bf16.msra.mxu0 0
  %1042 = vmatprep.subr.bf16.mxu0 0
  %1043 = vmatpush1.bf16.msra.mxu0 0
  %1044 = vmatprep.subr.bf16.mxu0 0
  %1045 = vmatpush1.bf16.msra.mxu0 0
  %1046 = vmatprep.mubr.bf16.mxu0 0
  %1047 = vmatmul.mubr.bf16.gmra.mrb[0].mxu0 %v818
  %v1048 = vpop.f32.mrb[0].mxu0
  %v1049 = vadd.f32 %v945, %v1048
  %v1050 = vpop.f32.mrb[0].mxu0
  %v1051 = vpop.f32.mrb[0].mxu0
  %v1052 = vadd.f32 %v948, %v1051
  %v1053 = vpop.f32.mrb[0].mxu0
  %1054 = vmatprep.mubr.bf16.mxu0 0
  %1055 = vmatmul.mubr.bf16.gmra.mrb[0].mxu0 %v819
  %v1056 = vpop.f32.mrb[0].mxu0
  %v1057 = vadd.f32 %v953, %v1056
  %v1058 = vpop.f32.mrb[0].mxu0
  %v1059 = vpop.f32.mrb[0].mxu0
  %v1060 = vadd.f32 %v956, %v1059
  %v1061 = vpop.f32.mrb[0].mxu0
  %1062 = vmatprep.mubr.bf16.mxu0 0
  %1063 = vmatmul.mubr.bf16.gmra.mrb[0].mxu0 %v820
  %v1064 = vpop.f32.mrb[0].mxu0
  %v1065 = vadd.f32 %v961, %v1064
  %v1066 = vpop.f32.mrb[0].mxu0
  %v1067 = vpop.f32.mrb[0].mxu0
  %v1068 = vpop.f32.mrb[0].mxu0
  %1069 = vdwg.mxu0
  %v1070 = vld [vmem:[#allocation2 + $0x2] sm:$0xff]
  %v1071 = vld [vmem:[#allocation2 + $0xa] sm:$0xff]
  %v1072 = vld [vmem:[#allocation2 + $0x12] sm:$0xff]
  %v1073 = vld [vmem:[#allocation2 + $0x1a] sm:$0xff]
  %v1074 = vld [vmem:[#allocation2 + $0x22] sm:$0x3]
  %v1075 = vpack.c.bf16 %v1071, %v1070
  %v1076 = vpack.c.bf16 %v1073, %v1072
  %v1077 = vpack.c.bf16 %v1074, %v1074
  %s1078 = scalar_lea.vmem %s4, 128
  %v1079 = vld [vmem:[%s1078] sm:$0xf]
  %v1080 = vld [vmem:[%s1078 + $0x4] sm:$0xf]
  %v1081 = vld [vmem:[%s1078 + $0x8] sm:$0xf]
  %v1082 = vld [vmem:[%s1078 + $0xc] sm:$0xf]
  %v1083 = vld [vmem:[%s1078 + $0x10] sm:$0xf]
  %v1084 = vld [vmem:[%s1078 + $0x14] sm:$0xf]
  %v1085 = vld [vmem:[%s1078 + $0x18] sm:$0xf]
  %v1086 = vld [vmem:[%s1078 + $0x1c] sm:$0xf]
  %v1087 = vld [vmem:[%s1078 + $0x20] sm:$0xf]
  %v1088 = vld [vmem:[%s1078 + $0x24] sm:$0xf]
  %v1089 = vld [vmem:[%s1078 + $0x28] sm:$0xf]
  %v1090 = vld [vmem:[%s1078 + $0x2c] sm:$0xf]
  %v1091 = vld [vmem:[%s1078 + $0x30] sm:$0xf]
  %v1092 = vld [vmem:[%s1078 + $0x34] sm:$0xf]
  %v1093 = vld [vmem:[%s1078 + $0x38] sm:$0xf]
  %v1094 = vld [vmem:[%s1078 + $0x3c] sm:$0xf]
  %v1111 = vunpack.c.l.b16 %v1079
  %v1112 = vunpack.c.l.b16 %v1080
  %v1113 = vunpack.c.l.b16 %v1081
  %v1114 = vunpack.c.l.b16 %v1082
  %v1115 = vunpack.c.l.b16 %v1083
  %v1116 = vunpack.c.l.b16 %v1084
  %v1117 = vunpack.c.l.b16 %v1085
  %v1118 = vunpack.c.l.b16 %v1086
  %v1119 = vunpack.c.l.b16 %v1087
  %v1120 = vunpack.c.l.b16 %v1088
  %v1121 = vunpack.c.l.b16 %v1089
  %v1122 = vunpack.c.l.b16 %v1090
  %v1123 = vunpack.c.l.b16 %v1091
  %v1124 = vunpack.c.l.b16 %v1092
  %v1125 = vunpack.c.l.b16 %v1093
  %v1126 = vunpack.c.l.b16 %v1094
  %v1127 = vpack.c.b16 %v1112, %v1111
  %v1128 = vpack.c.b16 %v1114, %v1113
  %v1129 = vpack.c.b16 %v1116, %v1115
  %v1130 = vpack.c.b16 %v1118, %v1117
  %v1131 = vpack.c.b16 %v1120, %v1119
  %v1132 = vpack.c.b16 %v1122, %v1121
  %v1133 = vpack.c.b16 %v1124, %v1123
  %v1134 = vpack.c.b16 %v1126, %v1125
  %1143 = vmatprep.subr.bf16.mxu0 0
  %1144 = vmatpush1.bf16.msra.mxu0 %v1127
  %1145 = vmatprep.subr.bf16.mxu0 0
  %1146 = vmatpush1.bf16.msra.mxu0 %v1128
  %1147 = vmatprep.subr.bf16.mxu0 0
  %1148 = vmatpush1.bf16.msra.mxu0 %v1129
  %1149 = vmatprep.subr.bf16.mxu0 0
  %1150 = vmatpush1.bf16.msra.mxu0 %v1130
  %1151 = vmatprep.subr.bf16.mxu0 0
  %1152 = vmatpush1.bf16.msra.mxu0 %v1131
  %1153 = vmatprep.subr.bf16.mxu0 0
  %1154 = vmatpush1.bf16.msra.mxu0 %v1132
  %1155 = vmatprep.subr.bf16.mxu0 0
  %1156 = vmatpush1.bf16.msra.mxu0 %v1133
  %1157 = vmatprep.subr.bf16.mxu0 0
  %1158 = vmatpush1.bf16.msra.mxu0 %v1134
  %1159 = vmatprep.subr.bf16.mxu0 0
  %1160 = vmatpush1.bf16.msra.mxu0 0
  %1161 = vmatprep.subr.bf16.mxu0 0
  %1162 = vmatpush1.bf16.msra.mxu0 0
  %1163 = vmatprep.subr.bf16.mxu0 0
  %1164 = vmatpush1.bf16.msra.mxu0 0
  %1165 = vmatprep.subr.bf16.mxu0 0
  %1166 = vmatpush1.bf16.msra.mxu0 0
  %1167 = vmatprep.subr.bf16.mxu0 0
  %1168 = vmatpush1.bf16.msra.mxu0 0
  %1169 = vmatprep.subr.bf16.mxu0 0
  %1170 = vmatpush1.bf16.msra.mxu0 0
  %1171 = vmatprep.subr.bf16.mxu0 0
  %1172 = vmatpush1.bf16.msra.mxu0 0
  %1173 = vmatprep.subr.bf16.mxu0 0
  %1174 = vmatpush1.bf16.msra.mxu0 0
  %1175 = vmatprep.mubr.bf16.mxu0 0
  %1176 = vmatmul.mubr.bf16.gmra.mrb[0].mxu0 %v1075
  %v1177 = vpop.f32.mrb[0].mxu0
  %v1178 = vadd.f32 0.0, %v1177
  %v1179 = vpop.f32.mrb[0].mxu0
  %v1180 = vpop.f32.mrb[0].mxu0
  %v1181 = vadd.f32 0.0, %v1180
  %v1182 = vpop.f32.mrb[0].mxu0
  %1183 = vmatprep.mubr.bf16.mxu0 0
  %1184 = vmatmul.mubr.bf16.gmra.mrb[0].mxu0 %v1076
  %v1185 = vpop.f32.mrb[0].mxu0
  %v1186 = vadd.f32 0.0, %v1185
  %v1187 = vpop.f32.mrb[0].mxu0
  %v1188 = vpop.f32.mrb[0].mxu0
  %v1189 = vadd.f32 0.0, %v1188
  %v1190 = vpop.f32.mrb[0].mxu0
  %1191 = vmatprep.mubr.bf16.mxu0 0
  %1192 = vmatmul.mubr.bf16.gmra.mrb[0].mxu0 %v1077
  %v1193 = vpop.f32.mrb[0].mxu0
  %v1194 = vadd.f32 0.0, %v1193
  %v1195 = vpop.f32.mrb[0].mxu0
  %v1196 = vpop.f32.mrb[0].mxu0
  %v1197 = vpop.f32.mrb[0].mxu0
  %1198 = vdwg.mxu0
  %v1199 = vadd.f32 %v1049, %v1178
  %v1200 = vadd.f32 %v1052, %v1181
  %v1201 = vadd.f32 %v1057, %v1186
  %v1202 = vadd.f32 %v1060, %v1189
  %v1203 = vadd.f32 %v1065, %v1194
  %v1204 = vmul.f32 %v1199, %v141
  %v1205 = vmul.f32 %v1200, %v142
  %v1206 = vmul.f32 %v1201, %v143
  %v1207 = vmul.f32 %v1202, %v144
  %v1208 = vmul.f32 %v1203, %v145
  %v1209 = vadd.f32 %v1204, %v1205
  %v1210 = vadd.f32 %v1209, %v1206
  %v1211 = vadd.f32 %v1210, %v1207
  %v1212 = vsel %vm545, %v1208, 0.0
  %v1213 = vadd.f32 %v1211, %v1212
  %v1214 = vrot.slane %v1213, 4
  %v1215 = vadd.f32 %v1213, %v1214
  %v1216 = vrot.slane %v1215, 2
  %v1217 = vadd.f32 %v1215, %v1216
  %v1218 = vrot.slane %v1217, 1
  %v1219 = vadd.f32 %v1217, %v1218
  %v1220 = vmul.f32 %v1199, %v1199
  %v1221 = vmul.f32 %v1200, %v1200
  %v1222 = vmul.f32 %v1201, %v1201
  %v1223 = vmul.f32 %v1202, %v1202
  %v1224 = vmul.f32 %v1203, %v1203
  %v1225 = vmul.f32 %v1220, %v141
  %v1226 = vmul.f32 %v1221, %v142
  %v1227 = vmul.f32 %v1222, %v143
  %v1228 = vmul.f32 %v1223, %v144
  %v1229 = vmul.f32 %v1224, %v145
  %v1230 = vadd.f32 %v1225, %v1226
  %v1231 = vadd.f32 %v1230, %v1227
  %v1232 = vadd.f32 %v1231, %v1228
  %v1233 = vsel %vm545, %v1229, 0.0
  %v1234 = vadd.f32 %v1232, %v1233
  %v1235 = vrot.slane %v1234, 4
  %v1236 = vadd.f32 %v1234, %v1235
  %v1237 = vrot.slane %v1236, 2
  %v1238 = vadd.f32 %v1236, %v1237
  %v1239 = vrot.slane %v1238, 1
  %v1240 = vadd.f32 %v1238, %v1239
  %v1241 = vsel %vm575, %v1219, %v1240
  %v1242 = vld [vmem:[%s7] sm:$0xff]
  %v1243 = vld [vmem:[%s7 + $0x8] sm:$0xff]
  %v1244 = vld [vmem:[%s7 + $0x10] sm:$0xff]
  %v1245 = vld [vmem:[%s7 + $0x18] sm:$0xff]
  %v1246 = vld [vmem:[%s7 + $0x20] sm:$0xff]
  %v1247 = vld [vmem:[%s7 + $0x28] sm:$0xff]
  %v1248 = vld [vmem:[%s7 + $0x30] sm:$0xff]
  %v1249 = vld [vmem:[%s7 + $0x38] sm:$0xff]
  %v1250 = vld [vmem:[%s7 + $0x40] sm:$0xff]
  %v1251 = vld [vmem:[%s7 + $0x48] sm:$0xff]
  %v1252 = vld [vmem:[%s7 + $0x50] sm:$0xff]
  %v1253 = vld [vmem:[%s7 + $0x58] sm:$0xff]
  %v1254 = vld [vmem:[%s7 + $0x60] sm:$0xff]
  %v1255 = vld [vmem:[%s7 + $0x68] sm:$0xff]
  %v1256 = vld [vmem:[%s7 + $0x70] sm:$0xff]
  %v1257 = vld [vmem:[%s7 + $0x78] sm:$0xff]
  %1258 = vmatprep.subr.mxu0 0.0
  %1259 = vmatpush1.msra.mxu0 %v1242
  %1260 = vmatprep.subr.mxu0 0.0
  %1261 = vmatpush1.msra.mxu0 %v1243
  %1262 = vmatprep.subr.mxu0 0.0
  %1263 = vmatpush1.msra.mxu0 %v1244
  %1264 = vmatprep.subr.mxu0 0.0
  %1265 = vmatpush1.msra.mxu0 %v1245
  %1266 = vmatprep.subr.mxu0 0.0
  %1267 = vmatpush1.msra.mxu0 %v1246
  %1268 = vmatprep.subr.mxu0 0.0
  %1269 = vmatpush1.msra.mxu0 %v1247
  %1270 = vmatprep.subr.mxu0 0.0
  %1271 = vmatpush1.msra.mxu0 %v1248
  %1272 = vmatprep.subr.mxu0 0.0
  %1273 = vmatpush1.msra.mxu0 %v1249
  %1274 = vmatprep.subr.mxu0 0.0
  %1275 = vmatpush1.msra.mxu0 %v1250
  %1276 = vmatprep.subr.mxu0 0.0
  %1277 = vmatpush1.msra.mxu0 %v1251
  %1278 = vmatprep.subr.mxu0 0.0
  %1279 = vmatpush1.msra.mxu0 %v1252
  %1280 = vmatprep.subr.mxu0 0.0
  %1281 = vmatpush1.msra.mxu0 %v1253
  %1282 = vmatprep.subr.mxu0 0.0
  %1283 = vmatpush1.msra.mxu0 %v1254
  %1284 = vmatprep.subr.mxu0 0.0
  %1285 = vmatpush1.msra.mxu0 %v1255
  %1286 = vmatprep.subr.mxu0 0.0
  %1287 = vmatpush1.msra.mxu0 %v1256
  %1288 = vmatprep.subr.mxu0 0.0
  %1289 = vmatpush1.msra.mxu0 %v1257
  %1290 = vmatprep.subr.mxu0 0.0
  %1291 = vmatpush1.msra.mxu0 0.0
  %1292 = vmatprep.subr.mxu0 0.0
  %1293 = vmatpush1.msra.mxu0 0.0
  %1294 = vmatprep.subr.mxu0 0.0
  %1295 = vmatpush1.msra.mxu0 0.0
  %1296 = vmatprep.subr.mxu0 0.0
  %1297 = vmatpush1.msra.mxu0 0.0
  %1298 = vmatprep.subr.mxu0 0.0
  %1299 = vmatpush1.msra.mxu0 0.0
  %1300 = vmatprep.subr.mxu0 0.0
  %1301 = vmatpush1.msra.mxu0 0.0
  %1302 = vmatprep.subr.mxu0 0.0
  %1303 = vmatpush1.msra.mxu0 0.0
  %1304 = vmatprep.subr.mxu0 0.0
  %1305 = vmatpush1.msra.mxu0 0.0
  %1306 = vmatprep.subr.mxu0 0.0
  %1307 = vmatpush1.msra.mxu0 0.0
  %1308 = vmatprep.subr.mxu0 0.0
  %1309 = vmatpush1.msra.mxu0 0.0
  %1310 = vmatprep.subr.mxu0 0.0
  %1311 = vmatpush1.msra.mxu0 0.0
  %1312 = vmatprep.subr.mxu0 0.0
  %1313 = vmatpush1.msra.mxu0 0.0
  %1314 = vmatprep.subr.mxu0 0.0
  %1315 = vmatpush1.msra.mxu0 0.0
  %1316 = vmatprep.subr.mxu0 0.0
  %1317 = vmatpush1.msra.mxu0 0.0
  %1318 = vmatprep.subr.mxu0 0.0
  %1319 = vmatpush1.msra.mxu0 0.0
  %1320 = vmatprep.subr.mxu0 0.0
  %1321 = vmatpush1.msra.mxu0 0.0
  %1322 = vmatprep.mubr.f32.mxu0 0.0
  %1323 = vmatmul.mubr.f32.gmra.mrb[0].mxu0 %v1241
  %v1324 = vpop.f32.mrb[0].mxu0
  %v1325 = vadd.f32 0.0, %v1324
  %v1326 = vpop.f32.mrb[0].mxu0
  %1327 = vdwg.mxu0
  %v1328 = vmul.f32 %v1325, 0.001953125
  %v1329 = vmul.f32 %v1328, %v1328
  %v1331 = vrot.slane %v1329, 7
  %v1333 = vsub.f32 %v1328, %v1331
  %v1334 = vld [vmem:[%s5] sm:$0x1]
  %v1335 = vadd.f32 %v1333, 1e-05
  %v1336 = vrsqrt.pop %v1335
  %v1339 = vunpack.c.l.s4 1966171168
  %v1340 = vunpack.c.0.s8 %v1339
  %v1341 = vlaneseq
  %v1342 = vshrl.u32 %v1341, 7
  %v1343 = vsub.s32 %v1340, %v1342
  %v1344 = vrot.slane %v1336, %v1343
  %v1345 = vcombine.high %v1344, %v1344
  %v1347 = vunpack.c.l.s4 1966171168
  %v1348 = vunpack.c.0.s8 %v1347
  %v1349 = vlaneseq
  %v1350 = vshrl.u32 %v1349, 7
  %v1351 = vsub.s32 %v1348, %v1350
  %v1352 = vrot.slane %v1345, %v1351
  %v1354 = vmul.f32 %v1334, %v1352
  %v1355 = vld [vmem:[%s6] sm:$0x1]
  %v1356 = vmul.f32 %v1328, %v1354
  %v1357 = vsub.f32 %v1355, %v1356
  %v1359 = vlaneseq
  %v1360 = vshrl.u32 %v1359, 7
  %v1361 = vsub.s32 0, %v1360
  %v1362 = vrot.slane %v1357, %v1361
  %v1364 = vsel %vm575, %v1354, %v1362
  %v1365 = vld [vmem:[%s8] sm:$0xff]
  %v1367 = vsel %vm701, %v1364, 0
  %1369 = vmatprep.subr.mxu0 0.0
  %1370 = vmatpush1.msra.mxu0 %v1365
  %1371 = vmatprep.subr.mxu0 0.0
  %1372 = vmatpush1.msra.mxu0 0.0
  %1373 = vmatprep.subr.mxu0 0.0
  %1374 = vmatpush1.msra.mxu0 0.0
  %1375 = vmatprep.subr.mxu0 0.0
  %1376 = vmatpush1.msra.mxu0 0.0
  %1377 = vmatprep.subr.mxu0 0.0
  %1378 = vmatpush1.msra.mxu0 0.0
  %1379 = vmatprep.subr.mxu0 0.0
  %1380 = vmatpush1.msra.mxu0 0.0
  %1381 = vmatprep.subr.mxu0 0.0
  %1382 = vmatpush1.msra.mxu0 0.0
  %1383 = vmatprep.subr.mxu0 0.0
  %1384 = vmatpush1.msra.mxu0 0.0
  %1385 = vmatprep.subr.mxu0 0.0
  %1386 = vmatpush1.msra.mxu0 0.0
  %1387 = vmatprep.subr.mxu0 0.0
  %1388 = vmatpush1.msra.mxu0 0.0
  %1389 = vmatprep.subr.mxu0 0.0
  %1390 = vmatpush1.msra.mxu0 0.0
  %1391 = vmatprep.subr.mxu0 0.0
  %1392 = vmatpush1.msra.mxu0 0.0
  %1393 = vmatprep.subr.mxu0 0.0
  %1394 = vmatpush1.msra.mxu0 0.0
  %1395 = vmatprep.subr.mxu0 0.0
  %1396 = vmatpush1.msra.mxu0 0.0
  %1397 = vmatprep.subr.mxu0 0.0
  %1398 = vmatpush1.msra.mxu0 0.0
  %1399 = vmatprep.subr.mxu0 0.0
  %1400 = vmatpush1.msra.mxu0 0.0
  %1401 = vmatprep.subr.mxu0 0.0
  %1402 = vmatpush1.msra.mxu0 0.0
  %1403 = vmatprep.subr.mxu0 0.0
  %1404 = vmatpush1.msra.mxu0 0.0
  %1405 = vmatprep.subr.mxu0 0.0
  %1406 = vmatpush1.msra.mxu0 0.0
  %1407 = vmatprep.subr.mxu0 0.0
  %1408 = vmatpush1.msra.mxu0 0.0
  %1409 = vmatprep.subr.mxu0 0.0
  %1410 = vmatpush1.msra.mxu0 0.0
  %1411 = vmatprep.subr.mxu0 0.0
  %1412 = vmatpush1.msra.mxu0 0.0
  %1413 = vmatprep.subr.mxu0 0.0
  %1414 = vmatpush1.msra.mxu0 0.0
  %1415 = vmatprep.subr.mxu0 0.0
  %1416 = vmatpush1.msra.mxu0 0.0
  %1417 = vmatprep.subr.mxu0 0.0
  %1418 = vmatpush1.msra.mxu0 0.0
  %1419 = vmatprep.subr.mxu0 0.0
  %1420 = vmatpush1.msra.mxu0 0.0
  %1421 = vmatprep.subr.mxu0 0.0
  %1422 = vmatpush1.msra.mxu0 0.0
  %1423 = vmatprep.subr.mxu0 0.0
  %1424 = vmatpush1.msra.mxu0 0.0
  %1425 = vmatprep.subr.mxu0 0.0
  %1426 = vmatpush1.msra.mxu0 0.0
  %1427 = vmatprep.subr.mxu0 0.0
  %1428 = vmatpush1.msra.mxu0 0.0
  %1429 = vmatprep.subr.mxu0 0.0
  %1430 = vmatpush1.msra.mxu0 0.0
  %1431 = vmatprep.subr.mxu0 0.0
  %1432 = vmatpush1.msra.mxu0 0.0
  %1433 = vmatprep.mubr.f32.mxu0 0.0
  %1434 = vmatmul.mubr.f32.gmra.mrb[0].mxu0 %v1367
  %v1435 = vpop.f32.mrb[0].mxu0
  %v1436 = vadd.f32 0.0, %v1435
  %v1437 = vpop.f32.mrb[0].mxu0
  %1438 = vdwg.mxu0
  %v1439 = vlaneseq
  %v1440 = vshrl.u32 %v1439, 7
  %v1441 = vsub.s32 0, %v1440
  %v1442 = vrot.slane %v1436, %v1441
  %v1443 = vmul.f32 %v1199, %v1442
  %v1444 = vmul.f32 %v1200, %v1442
  %v1445 = vlaneseq
  %v1446 = vshrl.u32 %v1445, 7
  %v1447 = vsub.s32 1, %v1446
  %v1448 = vrot.slane %v1436, %v1447
  %v1449 = vadd.f32 %v1443, %v1448
  %v1450 = vadd.f32 %v1444, %v1448
  %v1451 = vld [vmem:[%s0] sm:$0xff]
  %v1452 = vld [vmem:[%s0 + $0x8] sm:$0xff]
  %v1453 = vadd.f32 %v1449, %v1451
  %v1454 = vadd.f32 %v1450, %v1452
  %vm1455 = vcmp.gt.f32.partialorder %v1453, 0.0
  %vm1456 = vcmp.gt.f32.partialorder %v1454, 0.0
  %v1457 = vmul.f32 %v1453, 0.2
  %v1458 = vmul.f32 %v1454, 0.2
  %v1459 = vsel %vm1455, %v1453, %v1457
  %v1460 = vsel %vm1456, %v1454, %v1458
  %1461 = vst [vmem:[%s9] sm:$0xff] %v1459
  %1462 = vst [vmem:[%s9 + $0x8] sm:$0xff] %v1460
  %v1463 = vmul.f32 %v1201, %v1442
  %v1464 = vmul.f32 %v1202, %v1442
  %v1465 = vmul.f32 %v1203, %v1442
  %v1466 = vadd.f32 %v1463, %v1448
  %v1467 = vadd.f32 %v1464, %v1448
  %v1468 = vadd.f32 %v1465, %v1448
  %v1469 = vld [vmem:[%s0 + $0x10] sm:$0xff]
  %v1470 = vld [vmem:[%s0 + $0x18] sm:$0xff]
  %v1473 = vrot.slane %v1469, 6
  %v1474 = vrot.slane %v1470, 6
  %v1475 = vsel %vm545, %v1473, %v1474
  %v1479 = vadd.f32 %v1466, %v1473
  %v1480 = vadd.f32 %v1467, %v1475
  %v1481 = vadd.f32 %v1468, %v1474
  %vm1482 = vcmp.gt.f32.partialorder %v1479, 0.0
  %vm1483 = vcmp.gt.f32.partialorder %v1480, 0.0
  %vm1484 = vcmp.gt.f32.partialorder %v1481, 0.0
  %v1485 = vmul.f32 %v1479, 0.2
  %v1486 = vmul.f32 %v1480, 0.2
  %v1487 = vmul.f32 %v1481, 0.2
  %v1488 = vsel %vm1482, %v1479, %v1485
  %v1489 = vsel %vm1483, %v1480, %v1486
  %v1490 = vsel %vm1484, %v1481, %v1487
  %1491 = vst [vmem:[%s9 + $0xe] sm:$0xfc] %v1488
  %1492 = vst [vmem:[%s9 + $0x16] sm:$0xff] %v1489
  %1493 = vst [vmem:[%s9 + $0x1e] sm:$0x3] %v1490
  // Predicated region
  $region38: #{resblock_pallas.1} parent=0 // pred_check
    _
  $region39: #{resblock_pallas.1} parent=0 // pred_check_branch
    %1495 = sbr.rel (0) target = $region41
  $region40: #{resblock_pallas.1} parent=0 // pred_region
    _
  $region41: #{resblock_pallas.1} parent=0 // pred_fallthru
    _
  // Predicated region
  $region42: #{resblock_pallas.1} parent=0 // pred_check
    _
  $region43: #{resblock_pallas.1} parent=0 // pred_check_branch
    %1497 = sbr.rel (0) target = $region45
  $region44: #{resblock_pallas.1} parent=0 // pred_region
    _
  $region45: #{resblock_pallas.1} parent=0 // pred_fallthru
    _

</llo_original>
